<compile_context>
chip_gen: v7x
topology: tpu7x:2x2x1
jax: 0.10.0
libtpu: 0.0.40
codegen_flags: <defaults>
</compile_context>

<pallas_src>
import math

import jax
import jax.numpy as jnp
from jax import lax
from jax.experimental import pallas as pl
from jax.experimental.pallas import tpu as pltpu

NUM_HEADS = 4
LN_EPS = 1e-5
LANE = 128


# ---------------------------------------------------------------------------
# Fused kernel: [Linear+LN+ReLU] x N  ->  MHA over rows  ->  importance scale
# ---------------------------------------------------------------------------
def _make_fused_kernel(num_layers, num_heads, out_dims, slab_width):
    total = sum(out_dims)

    def kernel(*refs):
        imp_ref = refs[0]                                # SMEM (num_layers,)
        x_ref = refs[1]                                  # (B, D0) VMEM
        lrefs = refs[2:2 + 2 * num_layers]               # per layer: w, lnb
        (w_in_ref, b_in_ref, wo_ref, bo_ref) = refs[2 + 2 * num_layers:
                                                    2 + 2 * num_layers + 4]
        out_ref = refs[-1]                               # (B, slab_width) VMEM

        feats = []
        h = x_ref[...]
        S = h.shape[0]
        for i in range(num_layers):
            w = lrefs[2 * i][...]                        # (din, dout)
            lnb = lrefs[2 * i + 1][...]                  # (3, dout): [bias; gamma; beta]
            b, g, beta = lnb[0:1], lnb[1:2], lnb[2:3]
            y = jnp.dot(h, w, preferred_element_type=jnp.float32) + b
            # LayerNorm: single fused lane reduction for mean & mean-of-squares.
            stats = jnp.mean(jnp.concatenate([y, y * y], axis=0),
                             axis=-1, keepdims=True)     # (2S, 1)
            mu, msq = stats[:S], stats[S:]
            var = msq - mu * mu                          # biased var (PyTorch LN)
            y = (y - mu) * lax.rsqrt(var + LN_EPS)
            y = y * g + beta
            h = jnp.maximum(y, 0.0)
            # Dropout(p=0.1): identity at inference time.
            feats.append(h)

        # --- Multi-head self-attention over the row axis (seq = B, batch = 1) ---
        E = h.shape[-1]
        hd = E // num_heads
        scale = 1.0 / math.sqrt(hd)

        # One fused QKV projection: (S, E) @ (E, 3E) -> (S, 3E)
        qkv = jnp.dot(h, w_in_ref[...],
                      preferred_element_type=jnp.float32) + b_in_ref[...]
        q, k, v = qkv[:, :E], qkv[:, E:2 * E], qkv[:, 2 * E:]

        def heads(t):                                    # (S, E) -> (H, S, hd)
            return jnp.transpose(t.reshape(S, num_heads, hd), (1, 0, 2))

        qh, kh, vh = heads(q), heads(k), heads(v)
        s = jnp.einsum('hqd,hkd->hqk', qh, kh,
                       preferred_element_type=jnp.float32) * scale   # (H, S, S)
        s = s - jnp.max(s, axis=-1, keepdims=True)                    # batched softmax
        p = jnp.exp(s)
        p = p / jnp.sum(p, axis=-1, keepdims=True)                    # exact divide
        ctx = jnp.einsum('hqk,hkd->hqd', p, vh,
                         preferred_element_type=jnp.float32)          # (H, S, hd)
        ctx = jnp.transpose(ctx, (1, 0, 2)).reshape(S, E)             # concat heads
        feats[-1] = jnp.dot(ctx, wo_ref[...],
                            preferred_element_type=jnp.float32) + bo_ref[...]

        # --- layer_importance scaling + single lane-dense output slab ---
        parts = [feats[i] * imp_ref[i] for i in range(num_layers)]
        if slab_width > total:
            parts.append(jnp.zeros((S, slab_width - total), jnp.float32))
        out_ref[...] = jnp.concatenate(parts, axis=-1)

    return kernel


# ---------------------------------------------------------------------------
# Parameter init (deterministic, PyTorch-default-like), stored pre-packed.
# ---------------------------------------------------------------------------
def init_params(key, input_dim, hidden_dims, num_heads=NUM_HEADS):
    dims = [input_dim] + list(hidden_dims)
    n_layers = len(hidden_dims)
    keys = jax.random.split(key, 2 * n_layers + 2)
    ki = 0

    layers = []
    for i in range(n_layers):
        din, dout = dims[i], dims[i + 1]
        bound = 1.0 / math.sqrt(din)
        # stored transposed (Din, Dout) so the kernel computes x @ W
        w = jax.random.uniform(keys[ki], (din, dout), jnp.float32, -bound, bound); ki += 1
        b = jax.random.uniform(keys[ki], (dout,), jnp.float32, -bound, bound); ki += 1
        lnb = jnp.stack([b,
                         jnp.ones((dout,), jnp.float32),     # LN gamma
                         jnp.zeros((dout,), jnp.float32)])   # LN beta
        layers.append((w, lnb))

    E = dims[-1]
    xav = math.sqrt(6.0 / (E + 3 * E))                       # xavier_uniform on (3E, E)
    in_proj = jax.random.uniform(keys[ki], (3 * E, E), jnp.float32, -xav, xav); ki += 1
    w_in = in_proj.T                                         # (E, 3E): [Wq^T | Wk^T | Wv^T]
    b_in = jnp.zeros((1, 3 * E), jnp.float32)                # PyTorch in_proj_bias init = 0
    obound = 1.0 / math.sqrt(E)
    wo = jax.random.uniform(keys[ki], (E, E), jnp.float32, -obound, obound).T; ki += 1
    bo = jnp.zeros((1, E), jnp.float32)
    attn = (w_in, b_in, wo, bo)

    layer_importance = jnp.ones((n_layers,), jnp.float32)
    return {"layers": layers, "attn": attn, "layer_importance": layer_importance}


# ---------------------------------------------------------------------------
# Forward pass: a single pallas_call, one lane-dense slab output
# ---------------------------------------------------------------------------
def fractal_pattern_layer_forward(x, params):
    layers = params["layers"]
    attn = params["attn"]
    imp = params["layer_importance"]
    n_layers = len(layers)
    B = x.shape[0]
    out_dims = [w.shape[1] for (w, _) in layers]
    total = sum(out_dims)
    slab_width = max(LANE, ((total + LANE - 1) // LANE) * LANE)

    vmem = pl.BlockSpec(memory_space=pltpu.MemorySpace.VMEM)
    smem = pl.BlockSpec(memory_space=pltpu.MemorySpace.SMEM)

    flat_layer_params = [p for layer in layers for p in layer]
    args = [imp, x] + flat_layer_params + list(attn)

    slab = pl.pallas_call(
        _make_fused_kernel(n_layers, NUM_HEADS, out_dims, slab_width),
        out_shape=jax.ShapeDtypeStruct((B, slab_width), jnp.float32),
        in_specs=[smem] + [vmem] * (len(args) - 1),
        out_specs=vmem,
    )(*args)

    outs, off = [], 0
    for d in out_dims:
        outs.append(lax.slice_in_dim(slab, off, off + d, axis=1))
        off += d
    return outs

# TODO(synk): if B grows beyond a few hundred rows, add a row-axis grid with
# 256-512 row tiles, dimension_semantics=("parallel",) (shards across v7x's 2
# TensorCores), constant index_map for the weights, and bf16 casts on the MXU
# operands only (keep LN/softmax in f32); unnecessary at B=8.


if __name__ == "__main__":
    B = 8            # rows (batch of the PyTorch module; seq length for attention)
    input_dim = 32
    hidden_dims = [64, 32, 16]

    key = jax.random.PRNGKey(0)
    kx, kp = jax.random.split(key)
    x = jax.random.normal(kx, (B, input_dim), jnp.float32)
    params = init_params(kp, input_dim, hidden_dims)

    outs = fractal_pattern_layer_forward(x, params)
    for o in outs:
        jax.block_until_ready(o)

    assert outs[0].shape == (B, 64)
    assert outs[1].shape == (B, 32)
    assert outs[2].shape == (B, 16)
    print("KERNEL_OK")
</pallas_src>

<mosaic_0001>
module attributes {stable_mosaic.version = 11 : i64} {
  func.func @kernel(%arg0: memref<3xf32, #tpu.memory_space<smem>>, %arg1: memref<8x32xf32, #tpu.memory_space<vmem>>, %arg2: memref<32x64xf32, #tpu.memory_space<vmem>>, %arg3: memref<3x64xf32, #tpu.memory_space<vmem>>, %arg4: memref<64x32xf32, #tpu.memory_space<vmem>>, %arg5: memref<3x32xf32, #tpu.memory_space<vmem>>, %arg6: memref<32x16xf32, #tpu.memory_space<vmem>>, %arg7: memref<3x16xf32, #tpu.memory_space<vmem>>, %arg8: memref<16x48xf32, #tpu.memory_space<vmem>>, %arg9: memref<1x48xf32, #tpu.memory_space<vmem>>, %arg10: memref<16x16xf32, #tpu.memory_space<vmem>>, %arg11: memref<1x16xf32, #tpu.memory_space<vmem>>, %arg12: memref<8x128xf32, #tpu.memory_space<vmem>>) attributes {dimension_semantics = [], scalar_prefetch = 0 : i64, scratch_operands = 0 : i64, tpu.core_type = #tpu.core_type<tc>} {
    %c0 = arith.constant 0 : index
    %c0_0 = arith.constant 0 : index
    %0 = vector.load %arg1[%c0, %c0_0] : memref<8x32xf32, #tpu.memory_space<vmem>>, vector<8x32xf32>
    %c0_1 = arith.constant 0 : index
    %c0_2 = arith.constant 0 : index
    %1 = vector.load %arg2[%c0_1, %c0_2] : memref<32x64xf32, #tpu.memory_space<vmem>>, vector<32x64xf32>
    %c0_3 = arith.constant 0 : index
    %c0_4 = arith.constant 0 : index
    %2 = vector.load %arg3[%c0_3, %c0_4] : memref<3x64xf32, #tpu.memory_space<vmem>>, vector<3x64xf32>
    %3 = vector.extract_strided_slice %2 {offsets = [0, 0], sizes = [1, 64], strides = [1, 1]} : vector<3x64xf32> to vector<1x64xf32>
    %4 = vector.extract_strided_slice %2 {offsets = [1, 0], sizes = [1, 64], strides = [1, 1]} : vector<3x64xf32> to vector<1x64xf32>
    %5 = vector.extract_strided_slice %2 {offsets = [2, 0], sizes = [1, 64], strides = [1, 1]} : vector<3x64xf32> to vector<1x64xf32>
    %cst = arith.constant dense<0.000000e+00> : vector<8x64xf32>
    %6 = tpu.matmul %0, %1, %cst {dimension_numbers = #tpu.dot_dimension_numbers<[1], [0], [0], [1], [0, 0, 1, 1], [], []>} : vector<8x32xf32>, vector<32x64xf32>, vector<8x64xf32> -> vector<8x64xf32>
    %7 = vector.broadcast %3 : vector<1x64xf32> to vector<8x64xf32>
    %8 = arith.addf %6, %7 : vector<8x64xf32>
    %9 = arith.mulf %8, %8 : vector<8x64xf32>
    %10 = tpu.concatenate %8, %9 in 0 : vector<8x64xf32>, vector<8x64xf32> -> vector<16x64xf32>
    %cst_5 = arith.constant dense<0.000000e+00> : vector<16xf32>
    %11 = vector.multi_reduction <add>, %10, %cst_5 [1] : vector<16x64xf32> to vector<16xf32>
    %12 = vector.shape_cast %11 : vector<16xf32> to vector<16x1xf32>
    %cst_6 = arith.constant 6.400000e+01 : f32
    %13 = vector.broadcast %cst_6 : f32 to vector<16x1xf32>
    %14 = arith.divf %12, %13 : vector<16x1xf32>
    %15 = vector.extract_strided_slice %14 {offsets = [0, 0], sizes = [8, 1], strides = [1, 1]} : vector<16x1xf32> to vector<8x1xf32>
    %16 = vector.extract_strided_slice %14 {offsets = [8, 0], sizes = [8, 1], strides = [1, 1]} : vector<16x1xf32> to vector<8x1xf32>
    %17 = arith.mulf %15, %15 : vector<8x1xf32>
    %18 = arith.subf %16, %17 : vector<8x1xf32>
    %19 = vector.broadcast %15 : vector<8x1xf32> to vector<8x64xf32>
    %20 = arith.subf %8, %19 : vector<8x64xf32>
    %cst_7 = arith.constant 9.99999974E-6 : f32
    %21 = vector.broadcast %cst_7 : f32 to vector<8x1xf32>
    %22 = arith.addf %18, %21 : vector<8x1xf32>
    %23 = math.rsqrt %22 : vector<8x1xf32>
    %24 = vector.broadcast %23 : vector<8x1xf32> to vector<8x64xf32>
    %25 = arith.mulf %20, %24 : vector<8x64xf32>
    %26 = vector.broadcast %4 : vector<1x64xf32> to vector<8x64xf32>
    %27 = arith.mulf %25, %26 : vector<8x64xf32>
    %28 = vector.broadcast %5 : vector<1x64xf32> to vector<8x64xf32>
    %29 = arith.addf %27, %28 : vector<8x64xf32>
    %cst_8 = arith.constant 0.000000e+00 : f32
    %30 = vector.broadcast %cst_8 : f32 to vector<8x64xf32>
    %31 = arith.maximumf %29, %30 : vector<8x64xf32>
    %c0_9 = arith.constant 0 : index
    %c0_10 = arith.constant 0 : index
    %32 = vector.load %arg4[%c0_9, %c0_10] : memref<64x32xf32, #tpu.memory_space<vmem>>, vector<64x32xf32>
    %c0_11 = arith.constant 0 : index
    %c0_12 = arith.constant 0 : index
    %33 = vector.load %arg5[%c0_11, %c0_12] : memref<3x32xf32, #tpu.memory_space<vmem>>, vector<3x32xf32>
    %34 = vector.extract_strided_slice %33 {offsets = [0, 0], sizes = [1, 32], strides = [1, 1]} : vector<3x32xf32> to vector<1x32xf32>
    %35 = vector.extract_strided_slice %33 {offsets = [1, 0], sizes = [1, 32], strides = [1, 1]} : vector<3x32xf32> to vector<1x32xf32>
    %36 = vector.extract_strided_slice %33 {offsets = [2, 0], sizes = [1, 32], strides = [1, 1]} : vector<3x32xf32> to vector<1x32xf32>
    %cst_13 = arith.constant dense<0.000000e+00> : vector<8x32xf32>
    %37 = tpu.matmul %31, %32, %cst_13 {dimension_numbers = #tpu.dot_dimension_numbers<[1], [0], [0], [1], [0, 0, 1, 1], [], []>} : vector<8x64xf32>, vector<64x32xf32>, vector<8x32xf32> -> vector<8x32xf32>
    %38 = vector.broadcast %34 : vector<1x32xf32> to vector<8x32xf32>
    %39 = arith.addf %37, %38 : vector<8x32xf32>
    %40 = arith.mulf %39, %39 : vector<8x32xf32>
    %41 = tpu.concatenate %39, %40 in 0 : vector<8x32xf32>, vector<8x32xf32> -> vector<16x32xf32>
    %cst_14 = arith.constant dense<0.000000e+00> : vector<16xf32>
    %42 = vector.multi_reduction <add>, %41, %cst_14 [1] : vector<16x32xf32> to vector<16xf32>
    %43 = vector.shape_cast %42 : vector<16xf32> to vector<16x1xf32>
    %cst_15 = arith.constant 3.200000e+01 : f32
    %44 = vector.broadcast %cst_15 : f32 to vector<16x1xf32>
    %45 = arith.divf %43, %44 : vector<16x1xf32>
    %46 = vector.extract_strided_slice %45 {offsets = [0, 0], sizes = [8, 1], strides = [1, 1]} : vector<16x1xf32> to vector<8x1xf32>
    %47 = vector.extract_strided_slice %45 {offsets = [8, 0], sizes = [8, 1], strides = [1, 1]} : vector<16x1xf32> to vector<8x1xf32>
    %48 = arith.mulf %46, %46 : vector<8x1xf32>
    %49 = arith.subf %47, %48 : vector<8x1xf32>
    %50 = vector.broadcast %46 : vector<8x1xf32> to vector<8x32xf32>
    %51 = arith.subf %39, %50 : vector<8x32xf32>
    %cst_16 = arith.constant 9.99999974E-6 : f32
    %52 = vector.broadcast %cst_16 : f32 to vector<8x1xf32>
    %53 = arith.addf %49, %52 : vector<8x1xf32>
    %54 = math.rsqrt %53 : vector<8x1xf32>
    %55 = vector.broadcast %54 : vector<8x1xf32> to vector<8x32xf32>
    %56 = arith.mulf %51, %55 : vector<8x32xf32>
    %57 = vector.broadcast %35 : vector<1x32xf32> to vector<8x32xf32>
    %58 = arith.mulf %56, %57 : vector<8x32xf32>
    %59 = vector.broadcast %36 : vector<1x32xf32> to vector<8x32xf32>
    %60 = arith.addf %58, %59 : vector<8x32xf32>
    %cst_17 = arith.constant 0.000000e+00 : f32
    %61 = vector.broadcast %cst_17 : f32 to vector<8x32xf32>
    %62 = arith.maximumf %60, %61 : vector<8x32xf32>
    %c0_18 = arith.constant 0 : index
    %c0_19 = arith.constant 0 : index
    %63 = vector.load %arg6[%c0_18, %c0_19] : memref<32x16xf32, #tpu.memory_space<vmem>>, vector<32x16xf32>
    %c0_20 = arith.constant 0 : index
    %c0_21 = arith.constant 0 : index
    %64 = vector.load %arg7[%c0_20, %c0_21] : memref<3x16xf32, #tpu.memory_space<vmem>>, vector<3x16xf32>
    %65 = vector.extract_strided_slice %64 {offsets = [0, 0], sizes = [1, 16], strides = [1, 1]} : vector<3x16xf32> to vector<1x16xf32>
    %66 = vector.extract_strided_slice %64 {offsets = [1, 0], sizes = [1, 16], strides = [1, 1]} : vector<3x16xf32> to vector<1x16xf32>
    %67 = vector.extract_strided_slice %64 {offsets = [2, 0], sizes = [1, 16], strides = [1, 1]} : vector<3x16xf32> to vector<1x16xf32>
    %cst_22 = arith.constant dense<0.000000e+00> : vector<8x16xf32>
    %68 = tpu.matmul %62, %63, %cst_22 {dimension_numbers = #tpu.dot_dimension_numbers<[1], [0], [0], [1], [0, 0, 1, 1], [], []>} : vector<8x32xf32>, vector<32x16xf32>, vector<8x16xf32> -> vector<8x16xf32>
    %69 = vector.broadcast %65 : vector<1x16xf32> to vector<8x16xf32>
    %70 = arith.addf %68, %69 : vector<8x16xf32>
    %71 = arith.mulf %70, %70 : vector<8x16xf32>
    %72 = tpu.concatenate %70, %71 in 0 : vector<8x16xf32>, vector<8x16xf32> -> vector<16x16xf32>
    %cst_23 = arith.constant dense<0.000000e+00> : vector<16xf32>
    %73 = vector.multi_reduction <add>, %72, %cst_23 [1] : vector<16x16xf32> to vector<16xf32>
    %74 = vector.shape_cast %73 : vector<16xf32> to vector<16x1xf32>
    %cst_24 = arith.constant 1.600000e+01 : f32
    %75 = vector.broadcast %cst_24 : f32 to vector<16x1xf32>
    %76 = arith.divf %74, %75 : vector<16x1xf32>
    %77 = vector.extract_strided_slice %76 {offsets = [0, 0], sizes = [8, 1], strides = [1, 1]} : vector<16x1xf32> to vector<8x1xf32>
    %78 = vector.extract_strided_slice %76 {offsets = [8, 0], sizes = [8, 1], strides = [1, 1]} : vector<16x1xf32> to vector<8x1xf32>
    %79 = arith.mulf %77, %77 : vector<8x1xf32>
    %80 = arith.subf %78, %79 : vector<8x1xf32>
    %81 = vector.broadcast %77 : vector<8x1xf32> to vector<8x16xf32>
    %82 = arith.subf %70, %81 : vector<8x16xf32>
    %cst_25 = arith.constant 9.99999974E-6 : f32
    %83 = vector.broadcast %cst_25 : f32 to vector<8x1xf32>
    %84 = arith.addf %80, %83 : vector<8x1xf32>
    %85 = math.rsqrt %84 : vector<8x1xf32>
    %86 = vector.broadcast %85 : vector<8x1xf32> to vector<8x16xf32>
    %87 = arith.mulf %82, %86 : vector<8x16xf32>
    %88 = vector.broadcast %66 : vector<1x16xf32> to vector<8x16xf32>
    %89 = arith.mulf %87, %88 : vector<8x16xf32>
    %90 = vector.broadcast %67 : vector<1x16xf32> to vector<8x16xf32>
    %91 = arith.addf %89, %90 : vector<8x16xf32>
    %cst_26 = arith.constant 0.000000e+00 : f32
    %92 = vector.broadcast %cst_26 : f32 to vector<8x16xf32>
    %93 = arith.maximumf %91, %92 : vector<8x16xf32>
    %c0_27 = arith.constant 0 : index
    %c0_28 = arith.constant 0 : index
    %94 = vector.load %arg8[%c0_27, %c0_28] : memref<16x48xf32, #tpu.memory_space<vmem>>, vector<16x48xf32>
    %cst_29 = arith.constant dense<0.000000e+00> : vector<8x48xf32>
    %95 = tpu.matmul %93, %94, %cst_29 {dimension_numbers = #tpu.dot_dimension_numbers<[1], [0], [0], [1], [0, 0, 1, 1], [], []>} : vector<8x16xf32>, vector<16x48xf32>, vector<8x48xf32> -> vector<8x48xf32>
    %c0_30 = arith.constant 0 : index
    %c0_31 = arith.constant 0 : index
    %96 = vector.load %arg9[%c0_30, %c0_31] : memref<1x48xf32, #tpu.memory_space<vmem>>, vector<1x48xf32>
    %97 = vector.broadcast %96 : vector<1x48xf32> to vector<8x48xf32>
    %98 = arith.addf %95, %97 : vector<8x48xf32>
    %99 = vector.extract_strided_slice %98 {offsets = [0, 0], sizes = [8, 16], strides = [1, 1]} : vector<8x48xf32> to vector<8x16xf32>
    %100 = vector.extract_strided_slice %98 {offsets = [0, 16], sizes = [8, 16], strides = [1, 1]} : vector<8x48xf32> to vector<8x16xf32>
    %101 = vector.extract_strided_slice %98 {offsets = [0, 32], sizes = [8, 16], strides = [1, 1]} : vector<8x48xf32> to vector<8x16xf32>
    %102 = vector.shape_cast %99 : vector<8x16xf32> to vector<8x4x4xf32>
    %103 = tpu.transpose %102, [1, 0, 2] : vector<8x4x4xf32> -> vector<4x8x4xf32>
    %104 = vector.shape_cast %100 : vector<8x16xf32> to vector<8x4x4xf32>
    %105 = tpu.transpose %104, [1, 0, 2] : vector<8x4x4xf32> -> vector<4x8x4xf32>
    %106 = vector.shape_cast %101 : vector<8x16xf32> to vector<8x4x4xf32>
    %107 = tpu.transpose %106, [1, 0, 2] : vector<8x4x4xf32> -> vector<4x8x4xf32>
    "tpu.trace_start"() <{level = 10 : i32, message = "hqd,hkd->hqk"}> : () -> ()
    %cst_32 = arith.constant dense<0.000000e+00> : vector<4x8x8xf32>
    %108 = tpu.matmul %103, %105, %cst_32 {dimension_numbers = #tpu.dot_dimension_numbers<[2], [2], [1], [1], [0, 0, 0, 1, 1, 1], [0], [0]>} : vector<4x8x4xf32>, vector<4x8x4xf32>, vector<4x8x8xf32> -> vector<4x8x8xf32>
    "tpu.trace_stop"() : () -> ()
    %cst_33 = arith.constant 5.000000e-01 : f32
    %109 = vector.broadcast %cst_33 : f32 to vector<4x8x8xf32>
    %110 = arith.mulf %108, %109 : vector<4x8x8xf32>
    %cst_34 = arith.constant dense<0xFF800000> : vector<4x8xf32>
    %111 = vector.multi_reduction <maximumf>, %110, %cst_34 [2] : vector<4x8x8xf32> to vector<4x8xf32>
    %112 = vector.shape_cast %111 : vector<4x8xf32> to vector<4x8x1xf32>
    %113 = vector.broadcast %112 : vector<4x8x1xf32> to vector<4x8x8xf32>
    %114 = arith.subf %110, %113 : vector<4x8x8xf32>
    %115 = math.exp %114 : vector<4x8x8xf32>
    %cst_35 = arith.constant dense<0.000000e+00> : vector<4x8xf32>
    %116 = vector.multi_reduction <add>, %115, %cst_35 [2] : vector<4x8x8xf32> to vector<4x8xf32>
    %117 = vector.shape_cast %116 : vector<4x8xf32> to vector<4x8x1xf32>
    %118 = vector.broadcast %117 : vector<4x8x1xf32> to vector<4x8x8xf32>
    %119 = arith.divf %115, %118 : vector<4x8x8xf32>
    "tpu.trace_start"() <{level = 10 : i32, message = "hqk,hkd->hqd"}> : () -> ()
    %cst_36 = arith.constant dense<0.000000e+00> : vector<4x8x4xf32>
    %120 = tpu.matmul %119, %107, %cst_36 {dimension_numbers = #tpu.dot_dimension_numbers<[2], [1], [1], [2], [0, 0, 0, 1, 1, 2], [0], [0]>} : vector<4x8x8xf32>, vector<4x8x4xf32>, vector<4x8x4xf32> -> vector<4x8x4xf32>
    "tpu.trace_stop"() : () -> ()
    %121 = tpu.transpose %120, [1, 0, 2] : vector<4x8x4xf32> -> vector<8x4x4xf32>
    %122 = vector.shape_cast %121 : vector<8x4x4xf32> to vector<8x16xf32>
    %c0_37 = arith.constant 0 : index
    %c0_38 = arith.constant 0 : index
    %123 = vector.load %arg10[%c0_37, %c0_38] : memref<16x16xf32, #tpu.memory_space<vmem>>, vector<16x16xf32>
    %cst_39 = arith.constant dense<0.000000e+00> : vector<8x16xf32>
    %124 = tpu.matmul %122, %123, %cst_39 {dimension_numbers = #tpu.dot_dimension_numbers<[1], [0], [0], [1], [0, 0, 1, 1], [], []>} : vector<8x16xf32>, vector<16x16xf32>, vector<8x16xf32> -> vector<8x16xf32>
    %c0_40 = arith.constant 0 : index
    %c0_41 = arith.constant 0 : index
    %125 = vector.load %arg11[%c0_40, %c0_41] : memref<1x16xf32, #tpu.memory_space<vmem>>, vector<1x16xf32>
    %126 = vector.broadcast %125 : vector<1x16xf32> to vector<8x16xf32>
    %127 = arith.addf %124, %126 : vector<8x16xf32>
    %c0_42 = arith.constant 0 : index
    %128 = memref.load %arg0[%c0_42] : memref<3xf32, #tpu.memory_space<smem>>
    %129 = vector.broadcast %128 : f32 to vector<8x64xf32>
    %130 = arith.mulf %31, %129 : vector<8x64xf32>
    %c1 = arith.constant 1 : index
    %131 = memref.load %arg0[%c1] : memref<3xf32, #tpu.memory_space<smem>>
    %132 = vector.broadcast %131 : f32 to vector<8x32xf32>
    %133 = arith.mulf %62, %132 : vector<8x32xf32>
    %c2 = arith.constant 2 : index
    %134 = memref.load %arg0[%c2] : memref<3xf32, #tpu.memory_space<smem>>
    %135 = vector.broadcast %134 : f32 to vector<8x16xf32>
    %136 = arith.mulf %127, %135 : vector<8x16xf32>
    %cst_43 = arith.constant 0.000000e+00 : f32
    %137 = vector.broadcast %cst_43 : f32 to vector<8x16xf32>
    %138 = tpu.concatenate %130, %133, %136, %137 in 1 : vector<8x64xf32>, vector<8x32xf32>, vector<8x16xf32>, vector<8x16xf32> -> vector<8x128xf32>
    %c0_44 = arith.constant 0 : index
    %c0_45 = arith.constant 0 : index
    %139 = vector.load %arg12[%c0_44, %c0_45] : memref<8x128xf32, #tpu.memory_space<vmem>>, vector<8x128xf32>
    tpu.vector_store %arg12[%c0_44, %c0_45], %138 {strides = array<i32>} : memref<8x128xf32, #tpu.memory_space<vmem>>, vector<8x128xf32>,
    return
  }
}

</mosaic_0001>

<llo_original>
// kernel: tpu_custom_call.1
$region0: #{tpu_custom_call.1}
  #allocation0 [shape = 'u32[]', space=smem, size = 0x4, offset = 0x4, fixed_abs, tag = 'smem constant byte address 0x4 - core index']
  #allocation1 [shape = 'u32[144,128]{1,0:T(1,128)}', space=vmem, size = 0x12000, scoped, tag = 'internal scratch']
  %s0 = inlined_call_operand.vmem [shape: f32[3], index: 0, kind: input, shape index: {}]
  %s1 = inlined_call_operand.vmem [shape: f32[8,32], index: 1, kind: input, shape index: {}]
  %s2 = inlined_call_operand.vmem [shape: f32[32,64], index: 2, kind: input, shape index: {}]
  %s3 = inlined_call_operand.vmem [shape: f32[3,64], index: 3, kind: input, shape index: {}]
  %s4 = inlined_call_operand.vmem [shape: f32[64,32], index: 4, kind: input, shape index: {}]
  %s5 = inlined_call_operand.vmem [shape: f32[3,32], index: 5, kind: input, shape index: {}]
  %s6 = inlined_call_operand.vmem [shape: f32[32,16], index: 6, kind: input, shape index: {}]
  %s7 = inlined_call_operand.vmem [shape: f32[3,16], index: 7, kind: input, shape index: {}]
  %s8 = inlined_call_operand.vmem [shape: f32[16,48], index: 8, kind: input, shape index: {}]
  %s9 = inlined_call_operand.vmem [shape: f32[1,48], index: 9, kind: input, shape index: {}]
  %s10 = inlined_call_operand.vmem [shape: f32[16,16], index: 10, kind: input, shape index: {}]
  %s11 = inlined_call_operand.vmem [shape: f32[1,16], index: 11, kind: input, shape index: {}]
  %s12 = inlined_call_operand.hbm [shape: f32[8,128], index: 12, kind: output, shape index: {}]
  %s13 = sld [smem:[#allocation0]]
  $region62: #{tpu_custom_call.1} parent=0
    _
  %s15 = ssub.s32 1, %s13
  %s16 = scalar_select 0, %s15, %s13
  $region1: #{tpu_custom_call.1} parent=0
    #allocation2 [shape = 'u8[512]{0}', space=smem, size = 0x200, scoped, tag = 'input window, operand 0, single buffered']
    #allocation3 [shape = 's32[1]{0}', space=sflag, size = 0x4, scoped, tag = 'scoped memory for tpu_custom_call.1']
    #allocation4 [shape = 's32[1]{0}', space=sflag, size = 0x4, scoped, tag = 'scoped memory for tpu_custom_call.1']
    #allocation5 [shape = 'u8[4096]{0}', space=vmem, size = 0x1000, scoped, tag = 'output window, operand 0, single buffered']
    %17 = vsyncpa [#allocation4], 0
    %18 = vsyncpa [#allocation3], 0
    // Predicated region
    $region2: #{tpu_custom_call.1} parent=1 // pred_check
      _
    $region3: #{tpu_custom_call.1} parent=1 // pred_check_branch
      %20 = sbr.rel (0) target = $region5
    $region4: #{tpu_custom_call.1} parent=1 // pred_region
      %s22 = ssub.s32 16, 16
      %23 = vsyncadd [#allocation4], %s22
      %s25 = sshll.u32 %s0, 4
      %s26 = int_to_ptr.vmem [resolvable:$true] %s25
      %28 = dma.vmem_to_smem %s26, 16, [#allocation2], [#allocation4]
    $region5: #{tpu_custom_call.1} parent=1 // pred_fallthru
      _
    // Predicated region
    $region6: #{tpu_custom_call.1} parent=1 // pred_check
      _
    $region7: #{tpu_custom_call.1} parent=1 // pred_check_branch
      %30 = sbr.rel (0) target = $region9
    $region8: #{tpu_custom_call.1} parent=1 // pred_region
      _
    $region9: #{tpu_custom_call.1} parent=1 // pred_fallthru
      _
    // Predicated region
    $region10: #{tpu_custom_call.1} parent=1 // pred_check
      _
    $region11: #{tpu_custom_call.1} parent=1 // pred_check_branch
      %32 = sbr.rel (0) target = $region13
    $region12: #{tpu_custom_call.1} parent=1 // pred_region
      _
    $region13: #{tpu_custom_call.1} parent=1 // pred_fallthru
      _
    // Predicated region
    $region14: #{tpu_custom_call.1} parent=1 // pred_check
      _
    $region15: #{tpu_custom_call.1} parent=1 // pred_check_branch
      %34 = sbr.rel (0) target = $region17
    $region16: #{tpu_custom_call.1} parent=1 // pred_region
      _
    $region17: #{tpu_custom_call.1} parent=1 // pred_fallthru
      _
    // Predicated region
    $region18: #{tpu_custom_call.1} parent=1 // pred_check
      _
    $region19: #{tpu_custom_call.1} parent=1 // pred_check_branch
      %36 = sbr.rel (0) target = $region21
    $region20: #{tpu_custom_call.1} parent=1 // pred_region
      _
    $region21: #{tpu_custom_call.1} parent=1 // pred_fallthru
      _
    // Predicated region
    $region22: #{tpu_custom_call.1} parent=1 // pred_check
      _
    $region23: #{tpu_custom_call.1} parent=1 // pred_check_branch
      %38 = sbr.rel (0) target = $region25
    $region24: #{tpu_custom_call.1} parent=1 // pred_region
      _
    $region25: #{tpu_custom_call.1} parent=1 // pred_fallthru
      _
    // Predicated region
    $region26: #{tpu_custom_call.1} parent=1 // pred_check
      _
    $region27: #{tpu_custom_call.1} parent=1 // pred_check_branch
      %40 = sbr.rel (0) target = $region29
    $region28: #{tpu_custom_call.1} parent=1 // pred_region
      _
    $region29: #{tpu_custom_call.1} parent=1 // pred_fallthru
      _
    // Predicated region
    $region30: #{tpu_custom_call.1} parent=1 // pred_check
      _
    $region31: #{tpu_custom_call.1} parent=1 // pred_check_branch
      %42 = sbr.rel (0) target = $region33
    $region32: #{tpu_custom_call.1} parent=1 // pred_region
      _
    $region33: #{tpu_custom_call.1} parent=1 // pred_fallthru
      _
    // Predicated region
    $region34: #{tpu_custom_call.1} parent=1 // pred_check
      _
    $region35: #{tpu_custom_call.1} parent=1 // pred_check_branch
      %44 = sbr.rel (0) target = $region37
    $region36: #{tpu_custom_call.1} parent=1 // pred_region
      _
    $region37: #{tpu_custom_call.1} parent=1 // pred_fallthru
      _
    // Predicated region
    $region38: #{tpu_custom_call.1} parent=1 // pred_check
      _
    $region39: #{tpu_custom_call.1} parent=1 // pred_check_branch
      %46 = sbr.rel (0) target = $region41
    $region40: #{tpu_custom_call.1} parent=1 // pred_region
      _
    $region41: #{tpu_custom_call.1} parent=1 // pred_fallthru
      _
    // Predicated region
    $region42: #{tpu_custom_call.1} parent=1 // pred_check
      _
    $region43: #{tpu_custom_call.1} parent=1 // pred_check_branch
      %48 = sbr.rel (0) target = $region45
    $region44: #{tpu_custom_call.1} parent=1 // pred_region
      _
    $region45: #{tpu_custom_call.1} parent=1 // pred_fallthru
      _
    // Predicated region
    $region46: #{tpu_custom_call.1} parent=1 // pred_check
      _
    $region47: #{tpu_custom_call.1} parent=1 // pred_check_branch
      %50 = sbr.rel (0) target = $region49
    $region48: #{tpu_custom_call.1} parent=1 // pred_region
      _
    $region49: #{tpu_custom_call.1} parent=1 // pred_fallthru
      _
    // Predicated region
    $region50: #{tpu_custom_call.1} parent=1 // pred_check
      _
    $region51: #{tpu_custom_call.1} parent=1 // pred_check_branch
      %52 = sbr.rel (0) target = $region53
    $region52: #{tpu_custom_call.1} parent=1 // pred_region
      %53 = dma.done [#allocation4], 16
    $region53: #{tpu_custom_call.1} parent=1 // pred_fallthru
      _
    %54 = sfence
    %v55 = vld [vmem:[%s1] sm:$0xff]
    %v56 = vld [vmem:[%s2] sm:$0xff]
    %v57 = vld [vmem:[%s2 + $0x8] sm:$0xff]
    %v58 = vld [vmem:[%s2 + $0x10] sm:$0xff]
    %v59 = vld [vmem:[%s2 + $0x18] sm:$0xff]
    %v60 = vld [vmem:[%s3] sm:$0x7]
    %v61 = vlaneseq
    %v62 = vshrl.u32 %v61, 7
    %v63 = vsub.s32 0, %v62
    %v64 = vrot.slane %v60, %v63
    %vm65 = vcmask 261120
    %v67 = vsel %vm65, %v55, 0
    %69 = vmatprep.subr.mxu0 0.0
    %70 = vmatpush1.msra.mxu0 %v56
    %71 = vmatprep.subr.mxu0 0.0
    %72 = vmatpush1.msra.mxu0 %v57
    %73 = vmatprep.subr.mxu0 0.0
    %74 = vmatpush1.msra.mxu0 %v58
    %75 = vmatprep.subr.mxu0 0.0
    %76 = vmatpush1.msra.mxu0 %v59
    %77 = vmatprep.subr.mxu0 0.0
    %78 = vmatpush1.msra.mxu0 0.0
    %79 = vmatprep.subr.mxu0 0.0
    %80 = vmatpush1.msra.mxu0 0.0
    %81 = vmatprep.subr.mxu0 0.0
    %82 = vmatpush1.msra.mxu0 0.0
    %83 = vmatprep.subr.mxu0 0.0
    %84 = vmatpush1.msra.mxu0 0.0
    %85 = vmatprep.subr.mxu0 0.0
    %86 = vmatpush1.msra.mxu0 0.0
    %87 = vmatprep.subr.mxu0 0.0
    %88 = vmatpush1.msra.mxu0 0.0
    %89 = vmatprep.subr.mxu0 0.0
    %90 = vmatpush1.msra.mxu0 0.0
    %91 = vmatprep.subr.mxu0 0.0
    %92 = vmatpush1.msra.mxu0 0.0
    %93 = vmatprep.subr.mxu0 0.0
    %94 = vmatpush1.msra.mxu0 0.0
    %95 = vmatprep.subr.mxu0 0.0
    %96 = vmatpush1.msra.mxu0 0.0
    %97 = vmatprep.subr.mxu0 0.0
    %98 = vmatpush1.msra.mxu0 0.0
    %99 = vmatprep.subr.mxu0 0.0
    %100 = vmatpush1.msra.mxu0 0.0
    %101 = vmatprep.subr.mxu0 0.0
    %102 = vmatpush1.msra.mxu0 0.0
    %103 = vmatprep.subr.mxu0 0.0
    %104 = vmatpush1.msra.mxu0 0.0
    %105 = vmatprep.subr.mxu0 0.0
    %106 = vmatpush1.msra.mxu0 0.0
    %107 = vmatprep.subr.mxu0 0.0
    %108 = vmatpush1.msra.mxu0 0.0
    %109 = vmatprep.subr.mxu0 0.0
    %110 = vmatpush1.msra.mxu0 0.0
    %111 = vmatprep.subr.mxu0 0.0
    %112 = vmatpush1.msra.mxu0 0.0
    %113 = vmatprep.subr.mxu0 0.0
    %114 = vmatpush1.msra.mxu0 0.0
    %115 = vmatprep.subr.mxu0 0.0
    %116 = vmatpush1.msra.mxu0 0.0
    %117 = vmatprep.subr.mxu0 0.0
    %118 = vmatpush1.msra.mxu0 0.0
    %119 = vmatprep.subr.mxu0 0.0
    %120 = vmatpush1.msra.mxu0 0.0
    %121 = vmatprep.subr.mxu0 0.0
    %122 = vmatpush1.msra.mxu0 0.0
    %123 = vmatprep.subr.mxu0 0.0
    %124 = vmatpush1.msra.mxu0 0.0
    %125 = vmatprep.subr.mxu0 0.0
    %126 = vmatpush1.msra.mxu0 0.0
    %127 = vmatprep.subr.mxu0 0.0
    %128 = vmatpush1.msra.mxu0 0.0
    %129 = vmatprep.subr.mxu0 0.0
    %130 = vmatpush1.msra.mxu0 0.0
    %131 = vmatprep.subr.mxu0 0.0
    %132 = vmatpush1.msra.mxu0 0.0
    %133 = vmatprep.mubr.f32.mxu0 0.0
    %134 = vmatmul.mubr.f32.gmra.mrb[0].mxu0 %v67
    %v135 = vpop.f32.mrb[0].mxu0
    %v136 = vadd.f32 %v64, %v135
    %v137 = vpop.f32.mrb[0].mxu0
    %138 = vdwg.mxu0
    %v139 = vmul.f32 %v136, %v136
    %vm140 = vcmask 523264
    %v141 = vsel %vm140, %v136, 0.0
    %142 = vadd.xlane.f32.xlu0 %v141
    %v143 = vpop.xlane.xlu0 %142
    %v144 = vsel %vm140, %v139, 0.0
    %145 = vadd.xlane.f32.xlu0 %v144
    %v146 = vpop.xlane.xlu0 %145
    %v147 = vrcp.pop 64.0
    %v148 = vmul.f32 %v143, %v147
    %v149 = vmul.f32 %v146, %v147
    %v150 = vmul.f32 %v148, %v148
    %v151 = vsub.f32 %v149, %v150
    %v152 = vsub.f32 %v136, %v148
    %v153 = vadd.f32 %v151, 1e-05
    %v154 = vrsqrt.pop %v153
    %v155 = vmul.f32 %v152, %v154
    %v156 = vlaneseq
    %v157 = vshrl.u32 %v156, 7
    %v158 = vsub.s32 1, %v157
    %v159 = vrot.slane %v60, %v158
    %v160 = vmul.f32 %v155, %v159
    %v161 = vlaneseq
    %v162 = vshrl.u32 %v161, 7
    %v163 = vsub.s32 2, %v162
    %v164 = vrot.slane %v60, %v163
    %v165 = vadd.f32 %v160, %v164
    %v166 = vmax.f32 %v165, 0.0
    %v167 = vld [vmem:[%s4] sm:$0xff]
    %v168 = vld [vmem:[%s4 + $0x8] sm:$0xff]
    %v169 = vld [vmem:[%s4 + $0x10] sm:$0xff]
    %v170 = vld [vmem:[%s4 + $0x18] sm:$0xff]
    %v171 = vld [vmem:[%s4 + $0x20] sm:$0xff]
    %v172 = vld [vmem:[%s4 + $0x28] sm:$0xff]
    %v173 = vld [vmem:[%s4 + $0x30] sm:$0xff]
    %v174 = vld [vmem:[%s4 + $0x38] sm:$0xff]
    %v175 = vld [vmem:[%s5] sm:$0x7]
    %v176 = vlaneseq
    %v177 = vshrl.u32 %v176, 7
    %v178 = vsub.s32 0, %v177
    %v179 = vrot.slane %v175, %v178
    %v181 = vsel %vm140, %v166, 0
    %183 = vmatprep.subr.mxu0 0.0
    %184 = vmatpush1.msra.mxu0 %v167
    %185 = vmatprep.subr.mxu0 0.0
    %186 = vmatpush1.msra.mxu0 %v168
    %187 = vmatprep.subr.mxu0 0.0
    %188 = vmatpush1.msra.mxu0 %v169
    %189 = vmatprep.subr.mxu0 0.0
    %190 = vmatpush1.msra.mxu0 %v170
    %191 = vmatprep.subr.mxu0 0.0
    %192 = vmatpush1.msra.mxu0 %v171
    %193 = vmatprep.subr.mxu0 0.0
    %194 = vmatpush1.msra.mxu0 %v172
    %195 = vmatprep.subr.mxu0 0.0
    %196 = vmatpush1.msra.mxu0 %v173
    %197 = vmatprep.subr.mxu0 0.0
    %198 = vmatpush1.msra.mxu0 %v174
    %199 = vmatprep.subr.mxu0 0.0
    %200 = vmatpush1.msra.mxu0 0.0
    %201 = vmatprep.subr.mxu0 0.0
    %202 = vmatpush1.msra.mxu0 0.0
    %203 = vmatprep.subr.mxu0 0.0
    %204 = vmatpush1.msra.mxu0 0.0
    %205 = vmatprep.subr.mxu0 0.0
    %206 = vmatpush1.msra.mxu0 0.0
    %207 = vmatprep.subr.mxu0 0.0
    %208 = vmatpush1.msra.mxu0 0.0
    %209 = vmatprep.subr.mxu0 0.0
    %210 = vmatpush1.msra.mxu0 0.0
    %211 = vmatprep.subr.mxu0 0.0
    %212 = vmatpush1.msra.mxu0 0.0
    %213 = vmatprep.subr.mxu0 0.0
    %214 = vmatpush1.msra.mxu0 0.0
    %215 = vmatprep.subr.mxu0 0.0
    %216 = vmatpush1.msra.mxu0 0.0
    %217 = vmatprep.subr.mxu0 0.0
    %218 = vmatpush1.msra.mxu0 0.0
    %219 = vmatprep.subr.mxu0 0.0
    %220 = vmatpush1.msra.mxu0 0.0
    %221 = vmatprep.subr.mxu0 0.0
    %222 = vmatpush1.msra.mxu0 0.0
    %223 = vmatprep.subr.mxu0 0.0
    %224 = vmatpush1.msra.mxu0 0.0
    %225 = vmatprep.subr.mxu0 0.0
    %226 = vmatpush1.msra.mxu0 0.0
    %227 = vmatprep.subr.mxu0 0.0
    %228 = vmatpush1.msra.mxu0 0.0
    %229 = vmatprep.subr.mxu0 0.0
    %230 = vmatpush1.msra.mxu0 0.0
    %231 = vmatprep.subr.mxu0 0.0
    %232 = vmatpush1.msra.mxu0 0.0
    %233 = vmatprep.subr.mxu0 0.0
    %234 = vmatpush1.msra.mxu0 0.0
    %235 = vmatprep.subr.mxu0 0.0
    %236 = vmatpush1.msra.mxu0 0.0
    %237 = vmatprep.subr.mxu0 0.0
    %238 = vmatpush1.msra.mxu0 0.0
    %239 = vmatprep.subr.mxu0 0.0
    %240 = vmatpush1.msra.mxu0 0.0
    %241 = vmatprep.subr.mxu0 0.0
    %242 = vmatpush1.msra.mxu0 0.0
    %243 = vmatprep.subr.mxu0 0.0
    %244 = vmatpush1.msra.mxu0 0.0
    %245 = vmatprep.subr.mxu0 0.0
    %246 = vmatpush1.msra.mxu0 0.0
    %247 = vmatprep.mubr.f32.mxu0 0.0
    %248 = vmatmul.mubr.f32.gmra.mrb[0].mxu0 %v181
    %v249 = vpop.f32.mrb[0].mxu0
    %v250 = vadd.f32 %v179, %v249
    %v251 = vpop.f32.mrb[0].mxu0
    %252 = vdwg.mxu0
    %v253 = vmul.f32 %v250, %v250
    %v254 = vsel %vm65, %v250, 0.0
    %255 = vadd.xlane.f32.xlu0 %v254
    %v256 = vpop.xlane.xlu0 %255
    %v257 = vsel %vm65, %v253, 0.0
    %258 = vadd.xlane.f32.xlu0 %v257
    %v259 = vpop.xlane.xlu0 %258
    %v260 = vrcp.pop 32.0
    %v261 = vmul.f32 %v256, %v260
    %v262 = vmul.f32 %v259, %v260
    %v263 = vmul.f32 %v261, %v261
    %v264 = vsub.f32 %v262, %v263
    %v265 = vsub.f32 %v250, %v261
    %v266 = vadd.f32 %v264, 1e-05
    %v267 = vrsqrt.pop %v266
    %v268 = vmul.f32 %v265, %v267
    %v269 = vlaneseq
    %v270 = vshrl.u32 %v269, 7
    %v271 = vsub.s32 1, %v270
    %v272 = vrot.slane %v175, %v271
    %v273 = vmul.f32 %v268, %v272
    %v274 = vlaneseq
    %v275 = vshrl.u32 %v274, 7
    %v276 = vsub.s32 2, %v275
    %v277 = vrot.slane %v175, %v276
    %v278 = vadd.f32 %v273, %v277
    %v279 = vmax.f32 %v278, 0.0
    %v280 = vld [vmem:[%s6] sm:$0xff]
    %v281 = vld [vmem:[%s6 + $0x8] sm:$0xff]
    %v282 = vld [vmem:[%s6 + $0x10] sm:$0xff]
    %v283 = vld [vmem:[%s6 + $0x18] sm:$0xff]
    %v284 = vld [vmem:[%s7] sm:$0x7]
    %v285 = vlaneseq
    %v286 = vshrl.u32 %v285, 7
    %v287 = vsub.s32 0, %v286
    %v288 = vrot.slane %v284, %v287
    %v290 = vsel %vm65, %v279, 0
    %292 = vmatprep.subr.mxu0 0.0
    %293 = vmatpush1.msra.mxu0 %v280
    %294 = vmatprep.subr.mxu0 0.0
    %295 = vmatpush1.msra.mxu0 %v281
    %296 = vmatprep.subr.mxu0 0.0
    %297 = vmatpush1.msra.mxu0 %v282
    %298 = vmatprep.subr.mxu0 0.0
    %299 = vmatpush1.msra.mxu0 %v283
    %300 = vmatprep.subr.mxu0 0.0
    %301 = vmatpush1.msra.mxu0 0.0
    %302 = vmatprep.subr.mxu0 0.0
    %303 = vmatpush1.msra.mxu0 0.0
    %304 = vmatprep.subr.mxu0 0.0
    %305 = vmatpush1.msra.mxu0 0.0
    %306 = vmatprep.subr.mxu0 0.0
    %307 = vmatpush1.msra.mxu0 0.0
    %308 = vmatprep.subr.mxu0 0.0
    %309 = vmatpush1.msra.mxu0 0.0
    %310 = vmatprep.subr.mxu0 0.0
    %311 = vmatpush1.msra.mxu0 0.0
    %312 = vmatprep.subr.mxu0 0.0
    %313 = vmatpush1.msra.mxu0 0.0
    %314 = vmatprep.subr.mxu0 0.0
    %315 = vmatpush1.msra.mxu0 0.0
    %316 = vmatprep.subr.mxu0 0.0
    %317 = vmatpush1.msra.mxu0 0.0
    %318 = vmatprep.subr.mxu0 0.0
    %319 = vmatpush1.msra.mxu0 0.0
    %320 = vmatprep.subr.mxu0 0.0
    %321 = vmatpush1.msra.mxu0 0.0
    %322 = vmatprep.subr.mxu0 0.0
    %323 = vmatpush1.msra.mxu0 0.0
    %324 = vmatprep.subr.mxu0 0.0
    %325 = vmatpush1.msra.mxu0 0.0
    %326 = vmatprep.subr.mxu0 0.0
    %327 = vmatpush1.msra.mxu0 0.0
    %328 = vmatprep.subr.mxu0 0.0
    %329 = vmatpush1.msra.mxu0 0.0
    %330 = vmatprep.subr.mxu0 0.0
    %331 = vmatpush1.msra.mxu0 0.0
    %332 = vmatprep.subr.mxu0 0.0
    %333 = vmatpush1.msra.mxu0 0.0
    %334 = vmatprep.subr.mxu0 0.0
    %335 = vmatpush1.msra.mxu0 0.0
    %336 = vmatprep.subr.mxu0 0.0
    %337 = vmatpush1.msra.mxu0 0.0
    %338 = vmatprep.subr.mxu0 0.0
    %339 = vmatpush1.msra.mxu0 0.0
    %340 = vmatprep.subr.mxu0 0.0
    %341 = vmatpush1.msra.mxu0 0.0
    %342 = vmatprep.subr.mxu0 0.0
    %343 = vmatpush1.msra.mxu0 0.0
    %344 = vmatprep.subr.mxu0 0.0
    %345 = vmatpush1.msra.mxu0 0.0
    %346 = vmatprep.subr.mxu0 0.0
    %347 = vmatpush1.msra.mxu0 0.0
    %348 = vmatprep.subr.mxu0 0.0
    %349 = vmatpush1.msra.mxu0 0.0
    %350 = vmatprep.subr.mxu0 0.0
    %351 = vmatpush1.msra.mxu0 0.0
    %352 = vmatprep.subr.mxu0 0.0
    %353 = vmatpush1.msra.mxu0 0.0
    %354 = vmatprep.subr.mxu0 0.0
    %355 = vmatpush1.msra.mxu0 0.0
    %356 = vmatprep.mubr.f32.mxu0 0.0
    %357 = vmatmul.mubr.f32.gmra.mrb[0].mxu0 %v290
    %v358 = vpop.f32.mrb[0].mxu0
    %v359 = vadd.f32 %v288, %v358
    %v360 = vpop.f32.mrb[0].mxu0
    %361 = vdwg.mxu0
    %v362 = vmul.f32 %v359, %v359
    %vm363 = vcmask 130048
    %v364 = vsel %vm363, %v359, 0.0
    %365 = vadd.xlane.f32.xlu0 %v364
    %v366 = vpop.xlane.xlu0 %365
    %v367 = vsel %vm363, %v362, 0.0
    %368 = vadd.xlane.f32.xlu0 %v367
    %v369 = vpop.xlane.xlu0 %368
    %v370 = vrcp.pop 16.0
    %v371 = vmul.f32 %v366, %v370
    %v372 = vmul.f32 %v369, %v370
    %v373 = vmul.f32 %v371, %v371
    %v374 = vsub.f32 %v372, %v373
    %v375 = vsub.f32 %v359, %v371
    %v376 = vadd.f32 %v374, 1e-05
    %v377 = vrsqrt.pop %v376
    %v378 = vmul.f32 %v375, %v377
    %v379 = vlaneseq
    %v380 = vshrl.u32 %v379, 7
    %v381 = vsub.s32 1, %v380
    %v382 = vrot.slane %v284, %v381
    %v383 = vmul.f32 %v378, %v382
    %v384 = vlaneseq
    %v385 = vshrl.u32 %v384, 7
    %v386 = vsub.s32 2, %v385
    %v387 = vrot.slane %v284, %v386
    %v388 = vadd.f32 %v383, %v387
    %v389 = vmax.f32 %v388, 0.0
    %v390 = vld [vmem:[%s8] sm:$0xff]
    %v391 = vld [vmem:[%s8 + $0x8] sm:$0xff]
    %v392 = vld [vmem:[%s9] sm:$0x1]
    %v394 = vlaneseq
    %v395 = vshrl.u32 %v394, 7
    %v396 = vsub.s32 0, %v395
    %v397 = vrot.slane %v392, %v396
    %v400 = vsel %vm363, %v389, 0
    %402 = vmatprep.subr.mxu0 0.0
    %403 = vmatpush1.msra.mxu0 %v390
    %404 = vmatprep.subr.mxu0 0.0
    %405 = vmatpush1.msra.mxu0 %v391
    %406 = vmatprep.subr.mxu0 0.0
    %407 = vmatpush1.msra.mxu0 0.0
    %408 = vmatprep.subr.mxu0 0.0
    %409 = vmatpush1.msra.mxu0 0.0
    %410 = vmatprep.subr.mxu0 0.0
    %411 = vmatpush1.msra.mxu0 0.0
    %412 = vmatprep.subr.mxu0 0.0
    %413 = vmatpush1.msra.mxu0 0.0
    %414 = vmatprep.subr.mxu0 0.0
    %415 = vmatpush1.msra.mxu0 0.0
    %416 = vmatprep.subr.mxu0 0.0
    %417 = vmatpush1.msra.mxu0 0.0
    %418 = vmatprep.subr.mxu0 0.0
    %419 = vmatpush1.msra.mxu0 0.0
    %420 = vmatprep.subr.mxu0 0.0
    %421 = vmatpush1.msra.mxu0 0.0
    %422 = vmatprep.subr.mxu0 0.0
    %423 = vmatpush1.msra.mxu0 0.0
    %424 = vmatprep.subr.mxu0 0.0
    %425 = vmatpush1.msra.mxu0 0.0
    %426 = vmatprep.subr.mxu0 0.0
    %427 = vmatpush1.msra.mxu0 0.0
    %428 = vmatprep.subr.mxu0 0.0
    %429 = vmatpush1.msra.mxu0 0.0
    %430 = vmatprep.subr.mxu0 0.0
    %431 = vmatpush1.msra.mxu0 0.0
    %432 = vmatprep.subr.mxu0 0.0
    %433 = vmatpush1.msra.mxu0 0.0
    %434 = vmatprep.subr.mxu0 0.0
    %435 = vmatpush1.msra.mxu0 0.0
    %436 = vmatprep.subr.mxu0 0.0
    %437 = vmatpush1.msra.mxu0 0.0
    %438 = vmatprep.subr.mxu0 0.0
    %439 = vmatpush1.msra.mxu0 0.0
    %440 = vmatprep.subr.mxu0 0.0
    %441 = vmatpush1.msra.mxu0 0.0
    %442 = vmatprep.subr.mxu0 0.0
    %443 = vmatpush1.msra.mxu0 0.0
    %444 = vmatprep.subr.mxu0 0.0
    %445 = vmatpush1.msra.mxu0 0.0
    %446 = vmatprep.subr.mxu0 0.0
    %447 = vmatpush1.msra.mxu0 0.0
    %448 = vmatprep.subr.mxu0 0.0
    %449 = vmatpush1.msra.mxu0 0.0
    %450 = vmatprep.subr.mxu0 0.0
    %451 = vmatpush1.msra.mxu0 0.0
    %452 = vmatprep.subr.mxu0 0.0
    %453 = vmatpush1.msra.mxu0 0.0
    %454 = vmatprep.subr.mxu0 0.0
    %455 = vmatpush1.msra.mxu0 0.0
    %456 = vmatprep.subr.mxu0 0.0
    %457 = vmatpush1.msra.mxu0 0.0
    %458 = vmatprep.subr.mxu0 0.0
    %459 = vmatpush1.msra.mxu0 0.0
    %460 = vmatprep.subr.mxu0 0.0
    %461 = vmatpush1.msra.mxu0 0.0
    %462 = vmatprep.subr.mxu0 0.0
    %463 = vmatpush1.msra.mxu0 0.0
    %464 = vmatprep.subr.mxu0 0.0
    %465 = vmatpush1.msra.mxu0 0.0
    %466 = vmatprep.mubr.f32.mxu0 0.0
    %467 = vmatmul.mubr.f32.gmra.mrb[0].mxu0 %v400
    %v468 = vpop.f32.mrb[0].mxu0
    %v469 = vadd.f32 %v397, %v468
    %v470 = vpop.f32.mrb[0].mxu0
    %471 = vdwg.mxu0
    %473 = vrot.lane.b32.xlu0 %v469, 124
    %v474 = vpop.permute.xlu0 %473
    %476 = vrot.lane.b32.xlu0 %v469, 120
    %v477 = vpop.permute.xlu0 %476
    %479 = vrot.lane.b32.xlu0 %v469, 116
    %v480 = vpop.permute.xlu0 %479
    %v482 = vcombine.low %v469, %v477
    %v483 = vcombine.high %v469, %v477
    %v485 = vunpack.c.l.s4 1983009808
    %v486 = vunpack.c.0.s8 %v485
    %v487 = vlaneseq
    %v488 = vshrl.u32 %v487, 7
    %v489 = vsub.s32 %v486, %v488
    %v490 = vrot.slane %v482, %v489
    %v492 = vunpack.c.l.s4 1983009808
    %v493 = vunpack.c.0.s8 %v492
    %v494 = vlaneseq
    %v495 = vshrl.u32 %v494, 7
    %v496 = vsub.s32 %v493, %v495
    %v497 = vrot.slane %v483, %v496
    %v498 = vcombine.low %v474, %v480
    %v499 = vcombine.high %v474, %v480
    %v501 = vunpack.c.l.s4 1983009808
    %v502 = vunpack.c.0.s8 %v501
    %v503 = vlaneseq
    %v504 = vshrl.u32 %v503, 7
    %v505 = vsub.s32 %v502, %v504
    %v506 = vrot.slane %v498, %v505
    %v508 = vunpack.c.l.s4 1983009808
    %v509 = vunpack.c.0.s8 %v508
    %v510 = vlaneseq
    %v511 = vshrl.u32 %v510, 7
    %v512 = vsub.s32 %v509, %v511
    %v513 = vrot.slane %v499, %v512
    %v514 = vcombine.low %v490, %v506
    %v515 = vcombine.high %v490, %v506
    %v517 = vunpack.c.l.s4 1934713408
    %v518 = vunpack.c.0.s8 %v517
    %v519 = vlaneseq
    %v520 = vshrl.u32 %v519, 7
    %v521 = vsub.s32 %v518, %v520
    %v522 = vrot.slane %v514, %v521
    %v524 = vunpack.c.l.s4 1934713408
    %v525 = vunpack.c.0.s8 %v524
    %v526 = vlaneseq
    %v527 = vshrl.u32 %v526, 7
    %v528 = vsub.s32 %v525, %v527
    %v529 = vrot.slane %v515, %v528
    %v530 = vcombine.low %v497, %v513
    %v531 = vcombine.high %v497, %v513
    %v533 = vunpack.c.l.s4 1934713408
    %v534 = vunpack.c.0.s8 %v533
    %v535 = vlaneseq
    %v536 = vshrl.u32 %v535, 7
    %v537 = vsub.s32 %v534, %v536
    %v538 = vrot.slane %v530, %v537
    %v540 = vunpack.c.l.s4 1934713408
    %v541 = vunpack.c.0.s8 %v540
    %v542 = vlaneseq
    %v543 = vshrl.u32 %v542, 7
    %v544 = vsub.s32 %v541, %v543
    %v545 = vrot.slane %v531, %v544
    %v546 = vcombine.high %v522, 0.0
    %v547 = vcombine.high %v529, 0.0
    %v548 = vcombine.high %v538, 0.0
    %v549 = vcombine.high %v545, 0.0
    %v550 = vcombine.low %v522, %v529
    %v552 = vunpack.c.l.s4 1983009808
    %v553 = vunpack.c.0.s8 %v552
    %v554 = vlaneseq
    %v555 = vshrl.u32 %v554, 7
    %v556 = vsub.s32 %v553, %v555
    %v557 = vrot.slane %v550, %v556
    %v558 = vcombine.low %v546, %v547
    %v560 = vunpack.c.l.s4 1983009808
    %v561 = vunpack.c.0.s8 %v560
    %v562 = vlaneseq
    %v563 = vshrl.u32 %v562, 7
    %v564 = vsub.s32 %v561, %v563
    %v565 = vrot.slane %v558, %v564
    %v566 = vcombine.low %v538, %v545
    %v568 = vunpack.c.l.s4 1983009808
    %v569 = vunpack.c.0.s8 %v568
    %v570 = vlaneseq
    %v571 = vshrl.u32 %v570, 7
    %v572 = vsub.s32 %v569, %v571
    %v573 = vrot.slane %v566, %v572
    %v574 = vcombine.low %v548, %v549
    %v576 = vunpack.c.l.s4 1983009808
    %v577 = vunpack.c.0.s8 %v576
    %v578 = vlaneseq
    %v579 = vshrl.u32 %v578, 7
    %v580 = vsub.s32 %v577, %v579
    %v581 = vrot.slane %v574, %v580
    %v582 = vcombine.low %v557, %v565
    %v583 = vcombine.high %v557, %v565
    %v585 = vunpack.c.l.s4 1934713408
    %v586 = vunpack.c.0.s8 %v585
    %v587 = vlaneseq
    %v588 = vshrl.u32 %v587, 7
    %v589 = vsub.s32 %v586, %v588
    %v590 = vrot.slane %v582, %v589
    %v592 = vunpack.c.l.s4 1934713408
    %v593 = vunpack.c.0.s8 %v592
    %v594 = vlaneseq
    %v595 = vshrl.u32 %v594, 7
    %v596 = vsub.s32 %v593, %v595
    %v597 = vrot.slane %v583, %v596
    %v598 = vcombine.low %v573, %v581
    %v599 = vcombine.high %v573, %v581
    %v601 = vunpack.c.l.s4 1934713408
    %v602 = vunpack.c.0.s8 %v601
    %v603 = vlaneseq
    %v604 = vshrl.u32 %v603, 7
    %v605 = vsub.s32 %v602, %v604
    %v606 = vrot.slane %v598, %v605
    %v608 = vunpack.c.l.s4 1934713408
    %v609 = vunpack.c.0.s8 %v608
    %v610 = vlaneseq
    %v611 = vshrl.u32 %v610, 7
    %v612 = vsub.s32 %v609, %v611
    %v613 = vrot.slane %v599, %v612
    %v614 = vcombine.low %v590, %v606
    %v615 = vcombine.high %v590, %v606
    %v616 = vcombine.low %v597, %v613
    %v617 = vcombine.high %v597, %v613
    %618 = vrot.lane.b32.xlu0 %v469, 112
    %v619 = vpop.permute.xlu0 %618
    %620 = vrot.lane.b32.xlu0 %v474, 112
    %v621 = vpop.permute.xlu0 %620
    %622 = vrot.lane.b32.xlu0 %v477, 112
    %v623 = vpop.permute.xlu0 %622
    %624 = vrot.lane.b32.xlu0 %v480, 112
    %v625 = vpop.permute.xlu0 %624
    %v630 = vcombine.low %v619, %v623
    %v631 = vcombine.high %v619, %v623
    %v633 = vunpack.c.l.s4 1983009808
    %v634 = vunpack.c.0.s8 %v633
    %v635 = vlaneseq
    %v636 = vshrl.u32 %v635, 7
    %v637 = vsub.s32 %v634, %v636
    %v638 = vrot.slane %v630, %v637
    %v640 = vunpack.c.l.s4 1983009808
    %v641 = vunpack.c.0.s8 %v640
    %v642 = vlaneseq
    %v643 = vshrl.u32 %v642, 7
    %v644 = vsub.s32 %v641, %v643
    %v645 = vrot.slane %v631, %v644
    %v646 = vcombine.low %v621, %v625
    %v647 = vcombine.high %v621, %v625
    %v649 = vunpack.c.l.s4 1983009808
    %v650 = vunpack.c.0.s8 %v649
    %v651 = vlaneseq
    %v652 = vshrl.u32 %v651, 7
    %v653 = vsub.s32 %v650, %v652
    %v654 = vrot.slane %v646, %v653
    %v656 = vunpack.c.l.s4 1983009808
    %v657 = vunpack.c.0.s8 %v656
    %v658 = vlaneseq
    %v659 = vshrl.u32 %v658, 7
    %v660 = vsub.s32 %v657, %v659
    %v661 = vrot.slane %v647, %v660
    %v662 = vcombine.low %v638, %v654
    %v663 = vcombine.high %v638, %v654
    %v665 = vunpack.c.l.s4 1934713408
    %v666 = vunpack.c.0.s8 %v665
    %v667 = vlaneseq
    %v668 = vshrl.u32 %v667, 7
    %v669 = vsub.s32 %v666, %v668
    %v670 = vrot.slane %v662, %v669
    %v672 = vunpack.c.l.s4 1934713408
    %v673 = vunpack.c.0.s8 %v672
    %v674 = vlaneseq
    %v675 = vshrl.u32 %v674, 7
    %v676 = vsub.s32 %v673, %v675
    %v677 = vrot.slane %v663, %v676
    %v678 = vcombine.low %v645, %v661
    %v679 = vcombine.high %v645, %v661
    %v681 = vunpack.c.l.s4 1934713408
    %v682 = vunpack.c.0.s8 %v681
    %v683 = vlaneseq
    %v684 = vshrl.u32 %v683, 7
    %v685 = vsub.s32 %v682, %v684
    %v686 = vrot.slane %v678, %v685
    %v688 = vunpack.c.l.s4 1934713408
    %v689 = vunpack.c.0.s8 %v688
    %v690 = vlaneseq
    %v691 = vshrl.u32 %v690, 7
    %v692 = vsub.s32 %v689, %v691
    %v693 = vrot.slane %v679, %v692
    %v694 = vcombine.high %v670, 0.0
    %v695 = vcombine.high %v677, 0.0
    %v696 = vcombine.high %v686, 0.0
    %v697 = vcombine.high %v693, 0.0
    %v698 = vcombine.low %v670, %v677
    %v700 = vunpack.c.l.s4 1983009808
    %v701 = vunpack.c.0.s8 %v700
    %v702 = vlaneseq
    %v703 = vshrl.u32 %v702, 7
    %v704 = vsub.s32 %v701, %v703
    %v705 = vrot.slane %v698, %v704
    %v706 = vcombine.low %v694, %v695
    %v708 = vunpack.c.l.s4 1983009808
    %v709 = vunpack.c.0.s8 %v708
    %v710 = vlaneseq
    %v711 = vshrl.u32 %v710, 7
    %v712 = vsub.s32 %v709, %v711
    %v713 = vrot.slane %v706, %v712
    %v714 = vcombine.low %v686, %v693
    %v716 = vunpack.c.l.s4 1983009808
    %v717 = vunpack.c.0.s8 %v716
    %v718 = vlaneseq
    %v719 = vshrl.u32 %v718, 7
    %v720 = vsub.s32 %v717, %v719
    %v721 = vrot.slane %v714, %v720
    %v722 = vcombine.low %v696, %v697
    %v724 = vunpack.c.l.s4 1983009808
    %v725 = vunpack.c.0.s8 %v724
    %v726 = vlaneseq
    %v727 = vshrl.u32 %v726, 7
    %v728 = vsub.s32 %v725, %v727
    %v729 = vrot.slane %v722, %v728
    %v730 = vcombine.low %v705, %v713
    %v731 = vcombine.high %v705, %v713
    %v733 = vunpack.c.l.s4 1934713408
    %v734 = vunpack.c.0.s8 %v733
    %v735 = vlaneseq
    %v736 = vshrl.u32 %v735, 7
    %v737 = vsub.s32 %v734, %v736
    %v738 = vrot.slane %v730, %v737
    %v740 = vunpack.c.l.s4 1934713408
    %v741 = vunpack.c.0.s8 %v740
    %v742 = vlaneseq
    %v743 = vshrl.u32 %v742, 7
    %v744 = vsub.s32 %v741, %v743
    %v745 = vrot.slane %v731, %v744
    %v746 = vcombine.low %v721, %v729
    %v747 = vcombine.high %v721, %v729
    %v749 = vunpack.c.l.s4 1934713408
    %v750 = vunpack.c.0.s8 %v749
    %v751 = vlaneseq
    %v752 = vshrl.u32 %v751, 7
    %v753 = vsub.s32 %v750, %v752
    %v754 = vrot.slane %v746, %v753
    %v756 = vunpack.c.l.s4 1934713408
    %v757 = vunpack.c.0.s8 %v756
    %v758 = vlaneseq
    %v759 = vshrl.u32 %v758, 7
    %v760 = vsub.s32 %v757, %v759
    %v761 = vrot.slane %v747, %v760
    %v762 = vcombine.low %v738, %v754
    %v763 = vcombine.high %v738, %v754
    %v764 = vcombine.low %v745, %v761
    %v765 = vcombine.high %v745, %v761
    %766 = vrot.lane.b32.xlu0 %v469, 96
    %v767 = vpop.permute.xlu0 %766
    %768 = vrot.lane.b32.xlu0 %v474, 96
    %v769 = vpop.permute.xlu0 %768
    %770 = vrot.lane.b32.xlu0 %v477, 96
    %v771 = vpop.permute.xlu0 %770
    %772 = vrot.lane.b32.xlu0 %v480, 96
    %v773 = vpop.permute.xlu0 %772
    %v778 = vcombine.low %v767, %v771
    %v779 = vcombine.high %v767, %v771
    %v781 = vunpack.c.l.s4 1983009808
    %v782 = vunpack.c.0.s8 %v781
    %v783 = vlaneseq
    %v784 = vshrl.u32 %v783, 7
    %v785 = vsub.s32 %v782, %v784
    %v786 = vrot.slane %v778, %v785
    %v788 = vunpack.c.l.s4 1983009808
    %v789 = vunpack.c.0.s8 %v788
    %v790 = vlaneseq
    %v791 = vshrl.u32 %v790, 7
    %v792 = vsub.s32 %v789, %v791
    %v793 = vrot.slane %v779, %v792
    %v794 = vcombine.low %v769, %v773
    %v795 = vcombine.high %v769, %v773
    %v797 = vunpack.c.l.s4 1983009808
    %v798 = vunpack.c.0.s8 %v797
    %v799 = vlaneseq
    %v800 = vshrl.u32 %v799, 7
    %v801 = vsub.s32 %v798, %v800
    %v802 = vrot.slane %v794, %v801
    %v804 = vunpack.c.l.s4 1983009808
    %v805 = vunpack.c.0.s8 %v804
    %v806 = vlaneseq
    %v807 = vshrl.u32 %v806, 7
    %v808 = vsub.s32 %v805, %v807
    %v809 = vrot.slane %v795, %v808
    %v810 = vcombine.low %v786, %v802
    %v811 = vcombine.high %v786, %v802
    %v813 = vunpack.c.l.s4 1934713408
    %v814 = vunpack.c.0.s8 %v813
    %v815 = vlaneseq
    %v816 = vshrl.u32 %v815, 7
    %v817 = vsub.s32 %v814, %v816
    %v818 = vrot.slane %v810, %v817
    %v820 = vunpack.c.l.s4 1934713408
    %v821 = vunpack.c.0.s8 %v820
    %v822 = vlaneseq
    %v823 = vshrl.u32 %v822, 7
    %v824 = vsub.s32 %v821, %v823
    %v825 = vrot.slane %v811, %v824
    %v826 = vcombine.low %v793, %v809
    %v827 = vcombine.high %v793, %v809
    %v829 = vunpack.c.l.s4 1934713408
    %v830 = vunpack.c.0.s8 %v829
    %v831 = vlaneseq
    %v832 = vshrl.u32 %v831, 7
    %v833 = vsub.s32 %v830, %v832
    %v834 = vrot.slane %v826, %v833
    %v836 = vunpack.c.l.s4 1934713408
    %v837 = vunpack.c.0.s8 %v836
    %v838 = vlaneseq
    %v839 = vshrl.u32 %v838, 7
    %v840 = vsub.s32 %v837, %v839
    %v841 = vrot.slane %v827, %v840
    %v842 = vcombine.high %v818, 0.0
    %v843 = vcombine.high %v825, 0.0
    %v844 = vcombine.high %v834, 0.0
    %v845 = vcombine.high %v841, 0.0
    %v846 = vcombine.low %v818, %v825
    %v848 = vunpack.c.l.s4 1983009808
    %v849 = vunpack.c.0.s8 %v848
    %v850 = vlaneseq
    %v851 = vshrl.u32 %v850, 7
    %v852 = vsub.s32 %v849, %v851
    %v853 = vrot.slane %v846, %v852
    %v854 = vcombine.low %v842, %v843
    %v856 = vunpack.c.l.s4 1983009808
    %v857 = vunpack.c.0.s8 %v856
    %v858 = vlaneseq
    %v859 = vshrl.u32 %v858, 7
    %v860 = vsub.s32 %v857, %v859
    %v861 = vrot.slane %v854, %v860
    %v862 = vcombine.low %v834, %v841
    %v864 = vunpack.c.l.s4 1983009808
    %v865 = vunpack.c.0.s8 %v864
    %v866 = vlaneseq
    %v867 = vshrl.u32 %v866, 7
    %v868 = vsub.s32 %v865, %v867
    %v869 = vrot.slane %v862, %v868
    %v870 = vcombine.low %v844, %v845
    %v872 = vunpack.c.l.s4 1983009808
    %v873 = vunpack.c.0.s8 %v872
    %v874 = vlaneseq
    %v875 = vshrl.u32 %v874, 7
    %v876 = vsub.s32 %v873, %v875
    %v877 = vrot.slane %v870, %v876
    %v878 = vcombine.low %v853, %v861
    %v879 = vcombine.high %v853, %v861
    %v881 = vunpack.c.l.s4 1934713408
    %v882 = vunpack.c.0.s8 %v881
    %v883 = vlaneseq
    %v884 = vshrl.u32 %v883, 7
    %v885 = vsub.s32 %v882, %v884
    %v886 = vrot.slane %v878, %v885
    %v888 = vunpack.c.l.s4 1934713408
    %v889 = vunpack.c.0.s8 %v888
    %v890 = vlaneseq
    %v891 = vshrl.u32 %v890, 7
    %v892 = vsub.s32 %v889, %v891
    %v893 = vrot.slane %v879, %v892
    %v894 = vcombine.low %v869, %v877
    %v895 = vcombine.high %v869, %v877
    %v897 = vunpack.c.l.s4 1934713408
    %v898 = vunpack.c.0.s8 %v897
    %v899 = vlaneseq
    %v900 = vshrl.u32 %v899, 7
    %v901 = vsub.s32 %v898, %v900
    %v902 = vrot.slane %v894, %v901
    %v904 = vunpack.c.l.s4 1934713408
    %v905 = vunpack.c.0.s8 %v904
    %v906 = vlaneseq
    %v907 = vshrl.u32 %v906, 7
    %v908 = vsub.s32 %v905, %v907
    %v909 = vrot.slane %v895, %v908
    %v910 = vcombine.low %v886, %v902
    %v911 = vcombine.high %v886, %v902
    %v912 = vcombine.low %v893, %v909
    %v913 = vcombine.high %v893, %v909
    %vm914 = vcmask 31744
    %v916 = vsel %vm914, %v614, 0
    %v919 = vsel %vm914, %v762, 0
    %921 = vmatprep.subr.mxu0 0.0
    %922 = vmatpush1.xpose.msra.mxu0 %v919
    %923 = vmatprep.subr.mxu0 0.0
    %924 = vmatpush1.xpose.msra.mxu0 0.0
    %925 = vmatprep.subr.mxu0 0.0
    %926 = vmatpush1.xpose.msra.mxu0 0.0
    %927 = vmatprep.subr.mxu0 0.0
    %928 = vmatpush1.xpose.msra.mxu0 0.0
    %929 = vmatprep.subr.mxu0 0.0
    %930 = vmatpush1.xpose.msra.mxu0 0.0
    %931 = vmatprep.subr.mxu0 0.0
    %932 = vmatpush1.xpose.msra.mxu0 0.0
    %933 = vmatprep.subr.mxu0 0.0
    %934 = vmatpush1.xpose.msra.mxu0 0.0
    %935 = vmatprep.subr.mxu0 0.0
    %936 = vmatpush1.xpose.msra.mxu0 0.0
    %937 = vmatprep.subr.mxu0 0.0
    %938 = vmatpush1.xpose.msra.mxu0 0.0
    %939 = vmatprep.subr.mxu0 0.0
    %940 = vmatpush1.xpose.msra.mxu0 0.0
    %941 = vmatprep.subr.mxu0 0.0
    %942 = vmatpush1.xpose.msra.mxu0 0.0
    %943 = vmatprep.subr.mxu0 0.0
    %944 = vmatpush1.xpose.msra.mxu0 0.0
    %945 = vmatprep.subr.mxu0 0.0
    %946 = vmatpush1.xpose.msra.mxu0 0.0
    %947 = vmatprep.subr.mxu0 0.0
    %948 = vmatpush1.xpose.msra.mxu0 0.0
    %949 = vmatprep.subr.mxu0 0.0
    %950 = vmatpush1.xpose.msra.mxu0 0.0
    %951 = vmatprep.subr.mxu0 0.0
    %952 = vmatpush1.xpose.msra.mxu0 0.0
    %953 = vmatprep.subr.mxu0 0.0
    %954 = vmatpush1.xpose.msra.mxu0 0.0
    %955 = vmatprep.subr.mxu0 0.0
    %956 = vmatpush1.xpose.msra.mxu0 0.0
    %957 = vmatprep.subr.mxu0 0.0
    %958 = vmatpush1.xpose.msra.mxu0 0.0
    %959 = vmatprep.subr.mxu0 0.0
    %960 = vmatpush1.xpose.msra.mxu0 0.0
    %961 = vmatprep.subr.mxu0 0.0
    %962 = vmatpush1.xpose.msra.mxu0 0.0
    %963 = vmatprep.subr.mxu0 0.0
    %964 = vmatpush1.xpose.msra.mxu0 0.0
    %965 = vmatprep.subr.mxu0 0.0
    %966 = vmatpush1.xpose.msra.mxu0 0.0
    %967 = vmatprep.subr.mxu0 0.0
    %968 = vmatpush1.xpose.msra.mxu0 0.0
    %969 = vmatprep.subr.mxu0 0.0
    %970 = vmatpush1.xpose.msra.mxu0 0.0
    %971 = vmatprep.subr.mxu0 0.0
    %972 = vmatpush1.xpose.msra.mxu0 0.0
    %973 = vmatprep.subr.mxu0 0.0
    %974 = vmatpush1.xpose.msra.mxu0 0.0
    %975 = vmatprep.subr.mxu0 0.0
    %976 = vmatpush1.xpose.msra.mxu0 0.0
    %977 = vmatprep.subr.mxu0 0.0
    %978 = vmatpush1.xpose.msra.mxu0 0.0
    %979 = vmatprep.subr.mxu0 0.0
    %980 = vmatpush1.xpose.msra.mxu0 0.0
    %981 = vmatprep.subr.mxu0 0.0
    %982 = vmatpush1.xpose.msra.mxu0 0.0
    %983 = vmatprep.subr.mxu0 0.0
    %984 = vmatpush1.xpose.msra.mxu0 0.0
    %985 = vmatprep.mubr.f32.mxu0 0.0
    %986 = vmatmul.mubr.f32.gmra.mrb[0].mxu0 %v916
    %v987 = vpop.f32.mrb[0].mxu0
    %v988 = vadd.f32 0.0, %v987
    %v989 = vpop.f32.mrb[0].mxu0
    %990 = vdwg.mxu0
    %v992 = vsel %vm914, %v615, 0
    %v995 = vsel %vm914, %v763, 0
    %997 = vmatprep.subr.mxu0 0.0
    %998 = vmatpush1.xpose.msra.mxu0 %v995
    %999 = vmatprep.subr.mxu0 0.0
    %1000 = vmatpush1.xpose.msra.mxu0 0.0
    %1001 = vmatprep.subr.mxu0 0.0
    %1002 = vmatpush1.xpose.msra.mxu0 0.0
    %1003 = vmatprep.subr.mxu0 0.0
    %1004 = vmatpush1.xpose.msra.mxu0 0.0
    %1005 = vmatprep.subr.mxu0 0.0
    %1006 = vmatpush1.xpose.msra.mxu0 0.0
    %1007 = vmatprep.subr.mxu0 0.0
    %1008 = vmatpush1.xpose.msra.mxu0 0.0
    %1009 = vmatprep.subr.mxu0 0.0
    %1010 = vmatpush1.xpose.msra.mxu0 0.0
    %1011 = vmatprep.subr.mxu0 0.0
    %1012 = vmatpush1.xpose.msra.mxu0 0.0
    %1013 = vmatprep.subr.mxu0 0.0
    %1014 = vmatpush1.xpose.msra.mxu0 0.0
    %1015 = vmatprep.subr.mxu0 0.0
    %1016 = vmatpush1.xpose.msra.mxu0 0.0
    %1017 = vmatprep.subr.mxu0 0.0
    %1018 = vmatpush1.xpose.msra.mxu0 0.0
    %1019 = vmatprep.subr.mxu0 0.0
    %1020 = vmatpush1.xpose.msra.mxu0 0.0
    %1021 = vmatprep.subr.mxu0 0.0
    %1022 = vmatpush1.xpose.msra.mxu0 0.0
    %1023 = vmatprep.subr.mxu0 0.0
    %1024 = vmatpush1.xpose.msra.mxu0 0.0
    %1025 = vmatprep.subr.mxu0 0.0
    %1026 = vmatpush1.xpose.msra.mxu0 0.0
    %1027 = vmatprep.subr.mxu0 0.0
    %1028 = vmatpush1.xpose.msra.mxu0 0.0
    %1029 = vmatprep.subr.mxu0 0.0
    %1030 = vmatpush1.xpose.msra.mxu0 0.0
    %1031 = vmatprep.subr.mxu0 0.0
    %1032 = vmatpush1.xpose.msra.mxu0 0.0
    %1033 = vmatprep.subr.mxu0 0.0
    %1034 = vmatpush1.xpose.msra.mxu0 0.0
    %1035 = vmatprep.subr.mxu0 0.0
    %1036 = vmatpush1.xpose.msra.mxu0 0.0
    %1037 = vmatprep.subr.mxu0 0.0
    %1038 = vmatpush1.xpose.msra.mxu0 0.0
    %1039 = vmatprep.subr.mxu0 0.0
    %1040 = vmatpush1.xpose.msra.mxu0 0.0
    %1041 = vmatprep.subr.mxu0 0.0
    %1042 = vmatpush1.xpose.msra.mxu0 0.0
    %1043 = vmatprep.subr.mxu0 0.0
    %1044 = vmatpush1.xpose.msra.mxu0 0.0
    %1045 = vmatprep.subr.mxu0 0.0
    %1046 = vmatpush1.xpose.msra.mxu0 0.0
    %1047 = vmatprep.subr.mxu0 0.0
    %1048 = vmatpush1.xpose.msra.mxu0 0.0
    %1049 = vmatprep.subr.mxu0 0.0
    %1050 = vmatpush1.xpose.msra.mxu0 0.0
    %1051 = vmatprep.subr.mxu0 0.0
    %1052 = vmatpush1.xpose.msra.mxu0 0.0
    %1053 = vmatprep.subr.mxu0 0.0
    %1054 = vmatpush1.xpose.msra.mxu0 0.0
    %1055 = vmatprep.subr.mxu0 0.0
    %1056 = vmatpush1.xpose.msra.mxu0 0.0
    %1057 = vmatprep.subr.mxu0 0.0
    %1058 = vmatpush1.xpose.msra.mxu0 0.0
    %1059 = vmatprep.subr.mxu0 0.0
    %1060 = vmatpush1.xpose.msra.mxu0 0.0
    %1061 = vmatprep.mubr.f32.mxu0 0.0
    %1062 = vmatmul.mubr.f32.gmra.mrb[0].mxu0 %v992
    %v1063 = vpop.f32.mrb[0].mxu0
    %v1064 = vadd.f32 0.0, %v1063
    %v1065 = vpop.f32.mrb[0].mxu0
    %1066 = vdwg.mxu0
    %v1068 = vsel %vm914, %v616, 0
    %v1071 = vsel %vm914, %v764, 0
    %1073 = vmatprep.subr.mxu0 0.0
    %1074 = vmatpush1.xpose.msra.mxu0 %v1071
    %1075 = vmatprep.subr.mxu0 0.0
    %1076 = vmatpush1.xpose.msra.mxu0 0.0
    %1077 = vmatprep.subr.mxu0 0.0
    %1078 = vmatpush1.xpose.msra.mxu0 0.0
    %1079 = vmatprep.subr.mxu0 0.0
    %1080 = vmatpush1.xpose.msra.mxu0 0.0
    %1081 = vmatprep.subr.mxu0 0.0
    %1082 = vmatpush1.xpose.msra.mxu0 0.0
    %1083 = vmatprep.subr.mxu0 0.0
    %1084 = vmatpush1.xpose.msra.mxu0 0.0
    %1085 = vmatprep.subr.mxu0 0.0
    %1086 = vmatpush1.xpose.msra.mxu0 0.0
    %1087 = vmatprep.subr.mxu0 0.0
    %1088 = vmatpush1.xpose.msra.mxu0 0.0
    %1089 = vmatprep.subr.mxu0 0.0
    %1090 = vmatpush1.xpose.msra.mxu0 0.0
    %1091 = vmatprep.subr.mxu0 0.0
    %1092 = vmatpush1.xpose.msra.mxu0 0.0
    %1093 = vmatprep.subr.mxu0 0.0
    %1094 = vmatpush1.xpose.msra.mxu0 0.0
    %1095 = vmatprep.subr.mxu0 0.0
    %1096 = vmatpush1.xpose.msra.mxu0 0.0
    %1097 = vmatprep.subr.mxu0 0.0
    %1098 = vmatpush1.xpose.msra.mxu0 0.0
    %1099 = vmatprep.subr.mxu0 0.0
    %1100 = vmatpush1.xpose.msra.mxu0 0.0
    %1101 = vmatprep.subr.mxu0 0.0
    %1102 = vmatpush1.xpose.msra.mxu0 0.0
    %1103 = vmatprep.subr.mxu0 0.0
    %1104 = vmatpush1.xpose.msra.mxu0 0.0
    %1105 = vmatprep.subr.mxu0 0.0
    %1106 = vmatpush1.xpose.msra.mxu0 0.0
    %1107 = vmatprep.subr.mxu0 0.0
    %1108 = vmatpush1.xpose.msra.mxu0 0.0
    %1109 = vmatprep.subr.mxu0 0.0
    %1110 = vmatpush1.xpose.msra.mxu0 0.0
    %1111 = vmatprep.subr.mxu0 0.0
    %1112 = vmatpush1.xpose.msra.mxu0 0.0
    %1113 = vmatprep.subr.mxu0 0.0
    %1114 = vmatpush1.xpose.msra.mxu0 0.0
    %1115 = vmatprep.subr.mxu0 0.0
    %1116 = vmatpush1.xpose.msra.mxu0 0.0
    %1117 = vmatprep.subr.mxu0 0.0
    %1118 = vmatpush1.xpose.msra.mxu0 0.0
    %1119 = vmatprep.subr.mxu0 0.0
    %1120 = vmatpush1.xpose.msra.mxu0 0.0
    %1121 = vmatprep.subr.mxu0 0.0
    %1122 = vmatpush1.xpose.msra.mxu0 0.0
    %1123 = vmatprep.subr.mxu0 0.0
    %1124 = vmatpush1.xpose.msra.mxu0 0.0
    %1125 = vmatprep.subr.mxu0 0.0
    %1126 = vmatpush1.xpose.msra.mxu0 0.0
    %1127 = vmatprep.subr.mxu0 0.0
    %1128 = vmatpush1.xpose.msra.mxu0 0.0
    %1129 = vmatprep.subr.mxu0 0.0
    %1130 = vmatpush1.xpose.msra.mxu0 0.0
    %1131 = vmatprep.subr.mxu0 0.0
    %1132 = vmatpush1.xpose.msra.mxu0 0.0
    %1133 = vmatprep.subr.mxu0 0.0
    %1134 = vmatpush1.xpose.msra.mxu0 0.0
    %1135 = vmatprep.subr.mxu0 0.0
    %1136 = vmatpush1.xpose.msra.mxu0 0.0
    %1137 = vmatprep.mubr.f32.mxu0 0.0
    %1138 = vmatmul.mubr.f32.gmra.mrb[0].mxu0 %v1068
    %v1139 = vpop.f32.mrb[0].mxu0
    %v1140 = vadd.f32 0.0, %v1139
    %v1141 = vpop.f32.mrb[0].mxu0
    %1142 = vdwg.mxu0
    %v1144 = vsel %vm914, %v617, 0
    %v1147 = vsel %vm914, %v765, 0
    %1149 = vmatprep.subr.mxu0 0.0
    %1150 = vmatpush1.xpose.msra.mxu0 %v1147
    %1151 = vmatprep.subr.mxu0 0.0
    %1152 = vmatpush1.xpose.msra.mxu0 0.0
    %1153 = vmatprep.subr.mxu0 0.0
    %1154 = vmatpush1.xpose.msra.mxu0 0.0
    %1155 = vmatprep.subr.mxu0 0.0
    %1156 = vmatpush1.xpose.msra.mxu0 0.0
    %1157 = vmatprep.subr.mxu0 0.0
    %1158 = vmatpush1.xpose.msra.mxu0 0.0
    %1159 = vmatprep.subr.mxu0 0.0
    %1160 = vmatpush1.xpose.msra.mxu0 0.0
    %1161 = vmatprep.subr.mxu0 0.0
    %1162 = vmatpush1.xpose.msra.mxu0 0.0
    %1163 = vmatprep.subr.mxu0 0.0
    %1164 = vmatpush1.xpose.msra.mxu0 0.0
    %1165 = vmatprep.subr.mxu0 0.0
    %1166 = vmatpush1.xpose.msra.mxu0 0.0
    %1167 = vmatprep.subr.mxu0 0.0
    %1168 = vmatpush1.xpose.msra.mxu0 0.0
    %1169 = vmatprep.subr.mxu0 0.0
    %1170 = vmatpush1.xpose.msra.mxu0 0.0
    %1171 = vmatprep.subr.mxu0 0.0
    %1172 = vmatpush1.xpose.msra.mxu0 0.0
    %1173 = vmatprep.subr.mxu0 0.0
    %1174 = vmatpush1.xpose.msra.mxu0 0.0
    %1175 = vmatprep.subr.mxu0 0.0
    %1176 = vmatpush1.xpose.msra.mxu0 0.0
    %1177 = vmatprep.subr.mxu0 0.0
    %1178 = vmatpush1.xpose.msra.mxu0 0.0
    %1179 = vmatprep.subr.mxu0 0.0
    %1180 = vmatpush1.xpose.msra.mxu0 0.0
    %1181 = vmatprep.subr.mxu0 0.0
    %1182 = vmatpush1.xpose.msra.mxu0 0.0
    %1183 = vmatprep.subr.mxu0 0.0
    %1184 = vmatpush1.xpose.msra.mxu0 0.0
    %1185 = vmatprep.subr.mxu0 0.0
    %1186 = vmatpush1.xpose.msra.mxu0 0.0
    %1187 = vmatprep.subr.mxu0 0.0
    %1188 = vmatpush1.xpose.msra.mxu0 0.0
    %1189 = vmatprep.subr.mxu0 0.0
    %1190 = vmatpush1.xpose.msra.mxu0 0.0
    %1191 = vmatprep.subr.mxu0 0.0
    %1192 = vmatpush1.xpose.msra.mxu0 0.0
    %1193 = vmatprep.subr.mxu0 0.0
    %1194 = vmatpush1.xpose.msra.mxu0 0.0
    %1195 = vmatprep.subr.mxu0 0.0
    %1196 = vmatpush1.xpose.msra.mxu0 0.0
    %1197 = vmatprep.subr.mxu0 0.0
    %1198 = vmatpush1.xpose.msra.mxu0 0.0
    %1199 = vmatprep.subr.mxu0 0.0
    %1200 = vmatpush1.xpose.msra.mxu0 0.0
    %1201 = vmatprep.subr.mxu0 0.0
    %1202 = vmatpush1.xpose.msra.mxu0 0.0
    %1203 = vmatprep.subr.mxu0 0.0
    %1204 = vmatpush1.xpose.msra.mxu0 0.0
    %1205 = vmatprep.subr.mxu0 0.0
    %1206 = vmatpush1.xpose.msra.mxu0 0.0
    %1207 = vmatprep.subr.mxu0 0.0
    %1208 = vmatpush1.xpose.msra.mxu0 0.0
    %1209 = vmatprep.subr.mxu0 0.0
    %1210 = vmatpush1.xpose.msra.mxu0 0.0
    %1211 = vmatprep.subr.mxu0 0.0
    %1212 = vmatpush1.xpose.msra.mxu0 0.0
    %1213 = vmatprep.mubr.f32.mxu0 0.0
    %1214 = vmatmul.mubr.f32.gmra.mrb[0].mxu0 %v1144
    %v1215 = vpop.f32.mrb[0].mxu0
    %v1216 = vadd.f32 0.0, %v1215
    %v1217 = vpop.f32.mrb[0].mxu0
    %1218 = vdwg.mxu0
    %v1219 = vmul.f32 %v988, 0.5
    %v1220 = vmul.f32 %v1064, 0.5
    %v1221 = vmul.f32 %v1140, 0.5
    %v1222 = vmul.f32 %v1216, 0.5
    %vm1223 = vcmask 64512
    %v1224 = vsel %vm1223, %v1219, -inf
    %1225 = vmax.xlane.f32.xlu0 %v1224
    %v1226 = vpop.xlane.xlu0 %1225
    %v1227 = vsel %vm1223, %v1220, -inf
    %1228 = vmax.xlane.f32.xlu0 %v1227
    %v1229 = vpop.xlane.xlu0 %1228
    %v1230 = vsel %vm1223, %v1221, -inf
    %1231 = vmax.xlane.f32.xlu0 %v1230
    %v1232 = vpop.xlane.xlu0 %1231
    %v1233 = vsel %vm1223, %v1222, -inf
    %1234 = vmax.xlane.f32.xlu0 %v1233
    %v1235 = vpop.xlane.xlu0 %1234
    %v1236 = vsub.f32 %v1219, %v1226
    %v1237 = vsub.f32 %v1220, %v1229
    %v1238 = vsub.f32 %v1221, %v1232
    %v1239 = vsub.f32 %v1222, %v1235
    %v1240 = vmul.f32 %v1236, 1.442695
    %v1241 = vpow.pop %v1240
    %v1242 = vmul.f32 %v1237, 1.442695
    %v1243 = vpow.pop %v1242
    %v1244 = vmul.f32 %v1238, 1.442695
    %v1245 = vpow.pop %v1244
    %v1246 = vmul.f32 %v1239, 1.442695
    %v1247 = vpow.pop %v1246
    %v1248 = vsel %vm1223, %v1241, 0.0
    %1249 = vadd.xlane.f32.xlu0 %v1248
    %v1250 = vpop.xlane.xlu0 %1249
    %v1251 = vsel %vm1223, %v1243, 0.0
    %1252 = vadd.xlane.f32.xlu0 %v1251
    %v1253 = vpop.xlane.xlu0 %1252
    %v1254 = vsel %vm1223, %v1245, 0.0
    %1255 = vadd.xlane.f32.xlu0 %v1254
    %v1256 = vpop.xlane.xlu0 %1255
    %v1257 = vsel %vm1223, %v1247, 0.0
    %1258 = vadd.xlane.f32.xlu0 %v1257
    %v1259 = vpop.xlane.xlu0 %1258
    %v1260 = vrcp.pop %v1250
    %v1261 = vmul.f32 %v1241, %v1260
    %v1262 = vrcp.pop %v1253
    %v1263 = vmul.f32 %v1243, %v1262
    %v1264 = vrcp.pop %v1256
    %v1265 = vmul.f32 %v1245, %v1264
    %v1266 = vrcp.pop %v1259
    %v1267 = vmul.f32 %v1247, %v1266
    %v1269 = vsel %vm1223, %v1261, 0
    %1271 = vmatprep.subr.mxu0 0.0
    %1272 = vmatpush1.msra.mxu0 %v910
    %1273 = vmatprep.subr.mxu0 0.0
    %1274 = vmatpush1.msra.mxu0 0.0
    %1275 = vmatprep.subr.mxu0 0.0
    %1276 = vmatpush1.msra.mxu0 0.0
    %1277 = vmatprep.subr.mxu0 0.0
    %1278 = vmatpush1.msra.mxu0 0.0
    %1279 = vmatprep.subr.mxu0 0.0
    %1280 = vmatpush1.msra.mxu0 0.0
    %1281 = vmatprep.subr.mxu0 0.0
    %1282 = vmatpush1.msra.mxu0 0.0
    %1283 = vmatprep.subr.mxu0 0.0
    %1284 = vmatpush1.msra.mxu0 0.0
    %1285 = vmatprep.subr.mxu0 0.0
    %1286 = vmatpush1.msra.mxu0 0.0
    %1287 = vmatprep.subr.mxu0 0.0
    %1288 = vmatpush1.msra.mxu0 0.0
    %1289 = vmatprep.subr.mxu0 0.0
    %1290 = vmatpush1.msra.mxu0 0.0
    %1291 = vmatprep.subr.mxu0 0.0
    %1292 = vmatpush1.msra.mxu0 0.0
    %1293 = vmatprep.subr.mxu0 0.0
    %1294 = vmatpush1.msra.mxu0 0.0
    %1295 = vmatprep.subr.mxu0 0.0
    %1296 = vmatpush1.msra.mxu0 0.0
    %1297 = vmatprep.subr.mxu0 0.0
    %1298 = vmatpush1.msra.mxu0 0.0
    %1299 = vmatprep.subr.mxu0 0.0
    %1300 = vmatpush1.msra.mxu0 0.0
    %1301 = vmatprep.subr.mxu0 0.0
    %1302 = vmatpush1.msra.mxu0 0.0
    %1303 = vmatprep.subr.mxu0 0.0
    %1304 = vmatpush1.msra.mxu0 0.0
    %1305 = vmatprep.subr.mxu0 0.0
    %1306 = vmatpush1.msra.mxu0 0.0
    %1307 = vmatprep.subr.mxu0 0.0
    %1308 = vmatpush1.msra.mxu0 0.0
    %1309 = vmatprep.subr.mxu0 0.0
    %1310 = vmatpush1.msra.mxu0 0.0
    %1311 = vmatprep.subr.mxu0 0.0
    %1312 = vmatpush1.msra.mxu0 0.0
    %1313 = vmatprep.subr.mxu0 0.0
    %1314 = vmatpush1.msra.mxu0 0.0
    %1315 = vmatprep.subr.mxu0 0.0
    %1316 = vmatpush1.msra.mxu0 0.0
    %1317 = vmatprep.subr.mxu0 0.0
    %1318 = vmatpush1.msra.mxu0 0.0
    %1319 = vmatprep.subr.mxu0 0.0
    %1320 = vmatpush1.msra.mxu0 0.0
    %1321 = vmatprep.subr.mxu0 0.0
    %1322 = vmatpush1.msra.mxu0 0.0
    %1323 = vmatprep.subr.mxu0 0.0
    %1324 = vmatpush1.msra.mxu0 0.0
    %1325 = vmatprep.subr.mxu0 0.0
    %1326 = vmatpush1.msra.mxu0 0.0
    %1327 = vmatprep.subr.mxu0 0.0
    %1328 = vmatpush1.msra.mxu0 0.0
    %1329 = vmatprep.subr.mxu0 0.0
    %1330 = vmatpush1.msra.mxu0 0.0
    %1331 = vmatprep.subr.mxu0 0.0
    %1332 = vmatpush1.msra.mxu0 0.0
    %1333 = vmatprep.subr.mxu0 0.0
    %1334 = vmatpush1.msra.mxu0 0.0
    %1335 = vmatprep.mubr.f32.mxu0 0.0
    %1336 = vmatmul.mubr.f32.gmra.mrb[0].mxu0 %v1269
    %v1337 = vpop.f32.mrb[0].mxu0
    %v1338 = vadd.f32 0.0, %v1337
    %v1339 = vpop.f32.mrb[0].mxu0
    %1340 = vdwg.mxu0
    %v1342 = vsel %vm1223, %v1263, 0
    %1344 = vmatprep.subr.mxu0 0.0
    %1345 = vmatpush1.msra.mxu0 %v911
    %1346 = vmatprep.subr.mxu0 0.0
    %1347 = vmatpush1.msra.mxu0 0.0
    %1348 = vmatprep.subr.mxu0 0.0
    %1349 = vmatpush1.msra.mxu0 0.0
    %1350 = vmatprep.subr.mxu0 0.0
    %1351 = vmatpush1.msra.mxu0 0.0
    %1352 = vmatprep.subr.mxu0 0.0
    %1353 = vmatpush1.msra.mxu0 0.0
    %1354 = vmatprep.subr.mxu0 0.0
    %1355 = vmatpush1.msra.mxu0 0.0
    %1356 = vmatprep.subr.mxu0 0.0
    %1357 = vmatpush1.msra.mxu0 0.0
    %1358 = vmatprep.subr.mxu0 0.0
    %1359 = vmatpush1.msra.mxu0 0.0
    %1360 = vmatprep.subr.mxu0 0.0
    %1361 = vmatpush1.msra.mxu0 0.0
    %1362 = vmatprep.subr.mxu0 0.0
    %1363 = vmatpush1.msra.mxu0 0.0
    %1364 = vmatprep.subr.mxu0 0.0
    %1365 = vmatpush1.msra.mxu0 0.0
    %1366 = vmatprep.subr.mxu0 0.0
    %1367 = vmatpush1.msra.mxu0 0.0
    %1368 = vmatprep.subr.mxu0 0.0
    %1369 = vmatpush1.msra.mxu0 0.0
    %1370 = vmatprep.subr.mxu0 0.0
    %1371 = vmatpush1.msra.mxu0 0.0
    %1372 = vmatprep.subr.mxu0 0.0
    %1373 = vmatpush1.msra.mxu0 0.0
    %1374 = vmatprep.subr.mxu0 0.0
    %1375 = vmatpush1.msra.mxu0 0.0
    %1376 = vmatprep.subr.mxu0 0.0
    %1377 = vmatpush1.msra.mxu0 0.0
    %1378 = vmatprep.subr.mxu0 0.0
    %1379 = vmatpush1.msra.mxu0 0.0
    %1380 = vmatprep.subr.mxu0 0.0
    %1381 = vmatpush1.msra.mxu0 0.0
    %1382 = vmatprep.subr.mxu0 0.0
    %1383 = vmatpush1.msra.mxu0 0.0
    %1384 = vmatprep.subr.mxu0 0.0
    %1385 = vmatpush1.msra.mxu0 0.0
    %1386 = vmatprep.subr.mxu0 0.0
    %1387 = vmatpush1.msra.mxu0 0.0
    %1388 = vmatprep.subr.mxu0 0.0
    %1389 = vmatpush1.msra.mxu0 0.0
    %1390 = vmatprep.subr.mxu0 0.0
    %1391 = vmatpush1.msra.mxu0 0.0
    %1392 = vmatprep.subr.mxu0 0.0
    %1393 = vmatpush1.msra.mxu0 0.0
    %1394 = vmatprep.subr.mxu0 0.0
    %1395 = vmatpush1.msra.mxu0 0.0
    %1396 = vmatprep.subr.mxu0 0.0
    %1397 = vmatpush1.msra.mxu0 0.0
    %1398 = vmatprep.subr.mxu0 0.0
    %1399 = vmatpush1.msra.mxu0 0.0
    %1400 = vmatprep.subr.mxu0 0.0
    %1401 = vmatpush1.msra.mxu0 0.0
    %1402 = vmatprep.subr.mxu0 0.0
    %1403 = vmatpush1.msra.mxu0 0.0
    %1404 = vmatprep.subr.mxu0 0.0
    %1405 = vmatpush1.msra.mxu0 0.0
    %1406 = vmatprep.subr.mxu0 0.0
    %1407 = vmatpush1.msra.mxu0 0.0
    %1408 = vmatprep.mubr.f32.mxu0 0.0
    %1409 = vmatmul.mubr.f32.gmra.mrb[0].mxu0 %v1342
    %v1410 = vpop.f32.mrb[0].mxu0
    %v1411 = vadd.f32 0.0, %v1410
    %v1412 = vpop.f32.mrb[0].mxu0
    %1413 = vdwg.mxu0
    %v1415 = vsel %vm1223, %v1265, 0
    %1417 = vmatprep.subr.mxu0 0.0
    %1418 = vmatpush1.msra.mxu0 %v912
    %1419 = vmatprep.subr.mxu0 0.0
    %1420 = vmatpush1.msra.mxu0 0.0
    %1421 = vmatprep.subr.mxu0 0.0
    %1422 = vmatpush1.msra.mxu0 0.0
    %1423 = vmatprep.subr.mxu0 0.0
    %1424 = vmatpush1.msra.mxu0 0.0
    %1425 = vmatprep.subr.mxu0 0.0
    %1426 = vmatpush1.msra.mxu0 0.0
    %1427 = vmatprep.subr.mxu0 0.0
    %1428 = vmatpush1.msra.mxu0 0.0
    %1429 = vmatprep.subr.mxu0 0.0
    %1430 = vmatpush1.msra.mxu0 0.0
    %1431 = vmatprep.subr.mxu0 0.0
    %1432 = vmatpush1.msra.mxu0 0.0
    %1433 = vmatprep.subr.mxu0 0.0
    %1434 = vmatpush1.msra.mxu0 0.0
    %1435 = vmatprep.subr.mxu0 0.0
    %1436 = vmatpush1.msra.mxu0 0.0
    %1437 = vmatprep.subr.mxu0 0.0
    %1438 = vmatpush1.msra.mxu0 0.0
    %1439 = vmatprep.subr.mxu0 0.0
    %1440 = vmatpush1.msra.mxu0 0.0
    %1441 = vmatprep.subr.mxu0 0.0
    %1442 = vmatpush1.msra.mxu0 0.0
    %1443 = vmatprep.subr.mxu0 0.0
    %1444 = vmatpush1.msra.mxu0 0.0
    %1445 = vmatprep.subr.mxu0 0.0
    %1446 = vmatpush1.msra.mxu0 0.0
    %1447 = vmatprep.subr.mxu0 0.0
    %1448 = vmatpush1.msra.mxu0 0.0
    %1449 = vmatprep.subr.mxu0 0.0
    %1450 = vmatpush1.msra.mxu0 0.0
    %1451 = vmatprep.subr.mxu0 0.0
    %1452 = vmatpush1.msra.mxu0 0.0
    %1453 = vmatprep.subr.mxu0 0.0
    %1454 = vmatpush1.msra.mxu0 0.0
    %1455 = vmatprep.subr.mxu0 0.0
    %1456 = vmatpush1.msra.mxu0 0.0
    %1457 = vmatprep.subr.mxu0 0.0
    %1458 = vmatpush1.msra.mxu0 0.0
    %1459 = vmatprep.subr.mxu0 0.0
    %1460 = vmatpush1.msra.mxu0 0.0
    %1461 = vmatprep.subr.mxu0 0.0
    %1462 = vmatpush1.msra.mxu0 0.0
    %1463 = vmatprep.subr.mxu0 0.0
    %1464 = vmatpush1.msra.mxu0 0.0
    %1465 = vmatprep.subr.mxu0 0.0
    %1466 = vmatpush1.msra.mxu0 0.0
    %1467 = vmatprep.subr.mxu0 0.0
    %1468 = vmatpush1.msra.mxu0 0.0
    %1469 = vmatprep.subr.mxu0 0.0
    %1470 = vmatpush1.msra.mxu0 0.0
    %1471 = vmatprep.subr.mxu0 0.0
    %1472 = vmatpush1.msra.mxu0 0.0
    %1473 = vmatprep.subr.mxu0 0.0
    %1474 = vmatpush1.msra.mxu0 0.0
    %1475 = vmatprep.subr.mxu0 0.0
    %1476 = vmatpush1.msra.mxu0 0.0
    %1477 = vmatprep.subr.mxu0 0.0
    %1478 = vmatpush1.msra.mxu0 0.0
    %1479 = vmatprep.subr.mxu0 0.0
    %1480 = vmatpush1.msra.mxu0 0.0
    %1481 = vmatprep.mubr.f32.mxu0 0.0
    %1482 = vmatmul.mubr.f32.gmra.mrb[0].mxu0 %v1415
    %v1483 = vpop.f32.mrb[0].mxu0
    %v1484 = vadd.f32 0.0, %v1483
    %v1485 = vpop.f32.mrb[0].mxu0
    %1486 = vdwg.mxu0
    %v1488 = vsel %vm1223, %v1267, 0
    %1490 = vmatprep.subr.mxu0 0.0
    %1491 = vmatpush1.msra.mxu0 %v913
    %1492 = vmatprep.subr.mxu0 0.0
    %1493 = vmatpush1.msra.mxu0 0.0
    %1494 = vmatprep.subr.mxu0 0.0
    %1495 = vmatpush1.msra.mxu0 0.0
    %1496 = vmatprep.subr.mxu0 0.0
    %1497 = vmatpush1.msra.mxu0 0.0
    %1498 = vmatprep.subr.mxu0 0.0
    %1499 = vmatpush1.msra.mxu0 0.0
    %1500 = vmatprep.subr.mxu0 0.0
    %1501 = vmatpush1.msra.mxu0 0.0
    %1502 = vmatprep.subr.mxu0 0.0
    %1503 = vmatpush1.msra.mxu0 0.0
    %1504 = vmatprep.subr.mxu0 0.0
    %1505 = vmatpush1.msra.mxu0 0.0
    %1506 = vmatprep.subr.mxu0 0.0
    %1507 = vmatpush1.msra.mxu0 0.0
    %1508 = vmatprep.subr.mxu0 0.0
    %1509 = vmatpush1.msra.mxu0 0.0
    %1510 = vmatprep.subr.mxu0 0.0
    %1511 = vmatpush1.msra.mxu0 0.0
    %1512 = vmatprep.subr.mxu0 0.0
    %1513 = vmatpush1.msra.mxu0 0.0
    %1514 = vmatprep.subr.mxu0 0.0
    %1515 = vmatpush1.msra.mxu0 0.0
    %1516 = vmatprep.subr.mxu0 0.0
    %1517 = vmatpush1.msra.mxu0 0.0
    %1518 = vmatprep.subr.mxu0 0.0
    %1519 = vmatpush1.msra.mxu0 0.0
    %1520 = vmatprep.subr.mxu0 0.0
    %1521 = vmatpush1.msra.mxu0 0.0
    %1522 = vmatprep.subr.mxu0 0.0
    %1523 = vmatpush1.msra.mxu0 0.0
    %1524 = vmatprep.subr.mxu0 0.0
    %1525 = vmatpush1.msra.mxu0 0.0
    %1526 = vmatprep.subr.mxu0 0.0
    %1527 = vmatpush1.msra.mxu0 0.0
    %1528 = vmatprep.subr.mxu0 0.0
    %1529 = vmatpush1.msra.mxu0 0.0
    %1530 = vmatprep.subr.mxu0 0.0
    %1531 = vmatpush1.msra.mxu0 0.0
    %1532 = vmatprep.subr.mxu0 0.0
    %1533 = vmatpush1.msra.mxu0 0.0
    %1534 = vmatprep.subr.mxu0 0.0
    %1535 = vmatpush1.msra.mxu0 0.0
    %1536 = vmatprep.subr.mxu0 0.0
    %1537 = vmatpush1.msra.mxu0 0.0
    %1538 = vmatprep.subr.mxu0 0.0
    %1539 = vmatpush1.msra.mxu0 0.0
    %1540 = vmatprep.subr.mxu0 0.0
    %1541 = vmatpush1.msra.mxu0 0.0
    %1542 = vmatprep.subr.mxu0 0.0
    %1543 = vmatpush1.msra.mxu0 0.0
    %1544 = vmatprep.subr.mxu0 0.0
    %1545 = vmatpush1.msra.mxu0 0.0
    %1546 = vmatprep.subr.mxu0 0.0
    %1547 = vmatpush1.msra.mxu0 0.0
    %1548 = vmatprep.subr.mxu0 0.0
    %1549 = vmatpush1.msra.mxu0 0.0
    %1550 = vmatprep.subr.mxu0 0.0
    %1551 = vmatpush1.msra.mxu0 0.0
    %1552 = vmatprep.subr.mxu0 0.0
    %1553 = vmatpush1.msra.mxu0 0.0
    %1554 = vmatprep.mubr.f32.mxu0 0.0
    %1555 = vmatmul.mubr.f32.gmra.mrb[0].mxu0 %v1488
    %v1556 = vpop.f32.mrb[0].mxu0
    %v1557 = vadd.f32 0.0, %v1556
    %v1558 = vpop.f32.mrb[0].mxu0
    %1559 = vdwg.mxu0
    %v1560 = vcombine.low %v1338, %v1484
    %v1561 = vcombine.high %v1338, %v1484
    %v1563 = vunpack.c.l.s4 1983009808
    %v1564 = vunpack.c.0.s8 %v1563
    %v1565 = vlaneseq
    %v1566 = vshrl.u32 %v1565, 7
    %v1567 = vsub.s32 %v1564, %v1566
    %v1568 = vrot.slane %v1560, %v1567
    %v1570 = vunpack.c.l.s4 1983009808
    %v1571 = vunpack.c.0.s8 %v1570
    %v1572 = vlaneseq
    %v1573 = vshrl.u32 %v1572, 7
    %v1574 = vsub.s32 %v1571, %v1573
    %v1575 = vrot.slane %v1561, %v1574
    %v1576 = vcombine.low %v1411, %v1557
    %v1577 = vcombine.high %v1411, %v1557
    %v1579 = vunpack.c.l.s4 1983009808
    %v1580 = vunpack.c.0.s8 %v1579
    %v1581 = vlaneseq
    %v1582 = vshrl.u32 %v1581, 7
    %v1583 = vsub.s32 %v1580, %v1582
    %v1584 = vrot.slane %v1576, %v1583
    %v1586 = vunpack.c.l.s4 1983009808
    %v1587 = vunpack.c.0.s8 %v1586
    %v1588 = vlaneseq
    %v1589 = vshrl.u32 %v1588, 7
    %v1590 = vsub.s32 %v1587, %v1589
    %v1591 = vrot.slane %v1577, %v1590
    %v1592 = vcombine.low %v1568, %v1584
    %v1593 = vcombine.high %v1568, %v1584
    %v1595 = vunpack.c.l.s4 1934713408
    %v1596 = vunpack.c.0.s8 %v1595
    %v1597 = vlaneseq
    %v1598 = vshrl.u32 %v1597, 7
    %v1599 = vsub.s32 %v1596, %v1598
    %v1600 = vrot.slane %v1592, %v1599
    %v1602 = vunpack.c.l.s4 1934713408
    %v1603 = vunpack.c.0.s8 %v1602
    %v1604 = vlaneseq
    %v1605 = vshrl.u32 %v1604, 7
    %v1606 = vsub.s32 %v1603, %v1605
    %v1607 = vrot.slane %v1593, %v1606
    %v1608 = vcombine.low %v1575, %v1591
    %v1609 = vcombine.high %v1575, %v1591
    %v1611 = vunpack.c.l.s4 1934713408
    %v1612 = vunpack.c.0.s8 %v1611
    %v1613 = vlaneseq
    %v1614 = vshrl.u32 %v1613, 7
    %v1615 = vsub.s32 %v1612, %v1614
    %v1616 = vrot.slane %v1608, %v1615
    %v1618 = vunpack.c.l.s4 1934713408
    %v1619 = vunpack.c.0.s8 %v1618
    %v1620 = vlaneseq
    %v1621 = vshrl.u32 %v1620, 7
    %v1622 = vsub.s32 %v1619, %v1621
    %v1623 = vrot.slane %v1609, %v1622
    %v1624 = vcombine.high %v1600, 0.0
    %v1625 = vcombine.high %v1607, 0.0
    %v1626 = vcombine.high %v1616, 0.0
    %v1627 = vcombine.high %v1623, 0.0
    %v1628 = vcombine.low %v1600, %v1607
    %v1630 = vunpack.c.l.s4 1983009808
    %v1631 = vunpack.c.0.s8 %v1630
    %v1632 = vlaneseq
    %v1633 = vshrl.u32 %v1632, 7
    %v1634 = vsub.s32 %v1631, %v1633
    %v1635 = vrot.slane %v1628, %v1634
    %v1636 = vcombine.low %v1624, %v1625
    %v1638 = vunpack.c.l.s4 1983009808
    %v1639 = vunpack.c.0.s8 %v1638
    %v1640 = vlaneseq
    %v1641 = vshrl.u32 %v1640, 7
    %v1642 = vsub.s32 %v1639, %v1641
    %v1643 = vrot.slane %v1636, %v1642
    %v1644 = vcombine.low %v1616, %v1623
    %v1646 = vunpack.c.l.s4 1983009808
    %v1647 = vunpack.c.0.s8 %v1646
    %v1648 = vlaneseq
    %v1649 = vshrl.u32 %v1648, 7
    %v1650 = vsub.s32 %v1647, %v1649
    %v1651 = vrot.slane %v1644, %v1650
    %v1652 = vcombine.low %v1626, %v1627
    %v1654 = vunpack.c.l.s4 1983009808
    %v1655 = vunpack.c.0.s8 %v1654
    %v1656 = vlaneseq
    %v1657 = vshrl.u32 %v1656, 7
    %v1658 = vsub.s32 %v1655, %v1657
    %v1659 = vrot.slane %v1652, %v1658
    %v1660 = vcombine.low %v1635, %v1643
    %v1661 = vcombine.high %v1635, %v1643
    %v1663 = vunpack.c.l.s4 1934713408
    %v1664 = vunpack.c.0.s8 %v1663
    %v1665 = vlaneseq
    %v1666 = vshrl.u32 %v1665, 7
    %v1667 = vsub.s32 %v1664, %v1666
    %v1668 = vrot.slane %v1660, %v1667
    %v1670 = vunpack.c.l.s4 1934713408
    %v1671 = vunpack.c.0.s8 %v1670
    %v1672 = vlaneseq
    %v1673 = vshrl.u32 %v1672, 7
    %v1674 = vsub.s32 %v1671, %v1673
    %v1675 = vrot.slane %v1661, %v1674
    %v1676 = vcombine.low %v1651, %v1659
    %v1677 = vcombine.high %v1651, %v1659
    %v1679 = vunpack.c.l.s4 1934713408
    %v1680 = vunpack.c.0.s8 %v1679
    %v1681 = vlaneseq
    %v1682 = vshrl.u32 %v1681, 7
    %v1683 = vsub.s32 %v1680, %v1682
    %v1684 = vrot.slane %v1676, %v1683
    %v1686 = vunpack.c.l.s4 1934713408
    %v1687 = vunpack.c.0.s8 %v1686
    %v1688 = vlaneseq
    %v1689 = vshrl.u32 %v1688, 7
    %v1690 = vsub.s32 %v1687, %v1689
    %v1691 = vrot.slane %v1677, %v1690
    %v1692 = vcombine.low %v1668, %v1684
    %v1693 = vcombine.high %v1668, %v1684
    %v1694 = vcombine.low %v1675, %v1691
    %v1695 = vcombine.high %v1675, %v1691
    %1697 = vrot.lane.b32.xlu0 %v1693, 4
    %v1698 = vpop.permute.xlu0 %1697
    %1701 = vrot.lane.b32.xlu0 %v1694, 8
    %v1702 = vpop.permute.xlu0 %1701
    %1705 = vrot.lane.b32.xlu0 %v1695, 12
    %v1706 = vpop.permute.xlu0 %1705
    %v1708 = vsel %vm914, %v1692, %v1698
    %v1709 = vsel %vm1223, %v1708, %v1702
    %vm1710 = vcmask 97280
    %v1711 = vsel %vm1710, %v1709, %v1706
    %v1712 = vld [vmem:[%s10] sm:$0xff]
    %v1713 = vld [vmem:[%s10 + $0x8] sm:$0xff]
    %v1714 = vld [vmem:[%s11] sm:$0x1]
    %v1716 = vlaneseq
    %v1717 = vshrl.u32 %v1716, 7
    %v1718 = vsub.s32 0, %v1717
    %v1719 = vrot.slane %v1714, %v1718
    %v1722 = vsel %vm363, %v1711, 0
    %1724 = vmatprep.subr.mxu0 0.0
    %1725 = vmatpush1.msra.mxu0 %v1712
    %1726 = vmatprep.subr.mxu0 0.0
    %1727 = vmatpush1.msra.mxu0 %v1713
    %1728 = vmatprep.subr.mxu0 0.0
    %1729 = vmatpush1.msra.mxu0 0.0
    %1730 = vmatprep.subr.mxu0 0.0
    %1731 = vmatpush1.msra.mxu0 0.0
    %1732 = vmatprep.subr.mxu0 0.0
    %1733 = vmatpush1.msra.mxu0 0.0
    %1734 = vmatprep.subr.mxu0 0.0
    %1735 = vmatpush1.msra.mxu0 0.0
    %1736 = vmatprep.subr.mxu0 0.0
    %1737 = vmatpush1.msra.mxu0 0.0
    %1738 = vmatprep.subr.mxu0 0.0
    %1739 = vmatpush1.msra.mxu0 0.0
    %1740 = vmatprep.subr.mxu0 0.0
    %1741 = vmatpush1.msra.mxu0 0.0
    %1742 = vmatprep.subr.mxu0 0.0
    %1743 = vmatpush1.msra.mxu0 0.0
    %1744 = vmatprep.subr.mxu0 0.0
    %1745 = vmatpush1.msra.mxu0 0.0
    %1746 = vmatprep.subr.mxu0 0.0
    %1747 = vmatpush1.msra.mxu0 0.0
    %1748 = vmatprep.subr.mxu0 0.0
    %1749 = vmatpush1.msra.mxu0 0.0
    %1750 = vmatprep.subr.mxu0 0.0
    %1751 = vmatpush1.msra.mxu0 0.0
    %1752 = vmatprep.subr.mxu0 0.0
    %1753 = vmatpush1.msra.mxu0 0.0
    %1754 = vmatprep.subr.mxu0 0.0
    %1755 = vmatpush1.msra.mxu0 0.0
    %1756 = vmatprep.subr.mxu0 0.0
    %1757 = vmatpush1.msra.mxu0 0.0
    %1758 = vmatprep.subr.mxu0 0.0
    %1759 = vmatpush1.msra.mxu0 0.0
    %1760 = vmatprep.subr.mxu0 0.0
    %1761 = vmatpush1.msra.mxu0 0.0
    %1762 = vmatprep.subr.mxu0 0.0
    %1763 = vmatpush1.msra.mxu0 0.0
    %1764 = vmatprep.subr.mxu0 0.0
    %1765 = vmatpush1.msra.mxu0 0.0
    %1766 = vmatprep.subr.mxu0 0.0
    %1767 = vmatpush1.msra.mxu0 0.0
    %1768 = vmatprep.subr.mxu0 0.0
    %1769 = vmatpush1.msra.mxu0 0.0
    %1770 = vmatprep.subr.mxu0 0.0
    %1771 = vmatpush1.msra.mxu0 0.0
    %1772 = vmatprep.subr.mxu0 0.0
    %1773 = vmatpush1.msra.mxu0 0.0
    %1774 = vmatprep.subr.mxu0 0.0
    %1775 = vmatpush1.msra.mxu0 0.0
    %1776 = vmatprep.subr.mxu0 0.0
    %1777 = vmatpush1.msra.mxu0 0.0
    %1778 = vmatprep.subr.mxu0 0.0
    %1779 = vmatpush1.msra.mxu0 0.0
    %1780 = vmatprep.subr.mxu0 0.0
    %1781 = vmatpush1.msra.mxu0 0.0
    %1782 = vmatprep.subr.mxu0 0.0
    %1783 = vmatpush1.msra.mxu0 0.0
    %1784 = vmatprep.subr.mxu0 0.0
    %1785 = vmatpush1.msra.mxu0 0.0
    %1786 = vmatprep.subr.mxu0 0.0
    %1787 = vmatpush1.msra.mxu0 0.0
    %1788 = vmatprep.mubr.f32.mxu0 0.0
    %1789 = vmatmul.mubr.f32.gmra.mrb[0].mxu0 %v1722
    %v1790 = vpop.f32.mrb[0].mxu0
    %v1791 = vadd.f32 %v1719, %v1790
    %v1792 = vpop.f32.mrb[0].mxu0
    %1793 = vdwg.mxu0
    %s1794 = sld [smem:[#allocation2]]
    %v1795 = vstv %s1794
    %v1796 = vmul.f32 %v166, %v1795
    %s1797 = sld [smem:[#allocation2 + $0x1]]
    %v1798 = vstv %s1797
    %v1799 = vmul.f32 %v279, %v1798
    %s1800 = sld [smem:[#allocation2 + $0x2]]
    %v1801 = vstv %s1800
    %v1802 = vmul.f32 %v1791, %v1801
    %1804 = vrot.lane.b32.xlu0 %v1799, 64
    %v1805 = vpop.permute.xlu0 %1804
    %1808 = vrot.lane.b32.xlu0 %v1802, 96
    %v1809 = vpop.permute.xlu0 %1808
    %v1811 = vsel %vm140, %v1796, %v1805
    %vm1812 = vcmask 785408
    %v1813 = vsel %vm1812, %v1811, %v1809
    %vm1814 = vcmask 916480
    %v1815 = vsel %vm1814, %v1813, 0.0
    %1816 = vst [vmem:[#allocation5] sm:$0xff] %v1815
    // Predicated region
    $region54: #{tpu_custom_call.1} parent=1 // pred_check
      _
    $region55: #{tpu_custom_call.1} parent=1 // pred_check_branch
      %1818 = sbr.rel (0) target = $region57
    $region56: #{tpu_custom_call.1} parent=1 // pred_region
      %s1820 = ssub.s32 128, 128
      %1821 = vsyncadd [#allocation3], %s1820
      %s1823 = sshll.u32 [#allocation5], 4
      %s1824 = int_to_ptr.vmem [resolvable:$true] %s1823
      %1826 = dma.vmem_to_hbm [thread:$0]  %s1824, 128, %s12, [#allocation3]
    $region57: #{tpu_custom_call.1} parent=1 // pred_fallthru
      _
    // Predicated region
    $region58: #{tpu_custom_call.1} parent=1 // pred_check
      _
    $region59: #{tpu_custom_call.1} parent=1 // pred_check_branch
      %1828 = sbr.rel (0) target = $region61
    $region60: #{tpu_custom_call.1} parent=1 // pred_region
      %1829 = dma.done [#allocation3], 128
    $region61: #{tpu_custom_call.1} parent=1 // pred_fallthru
      _
    %1830 = vsyncpa [#allocation3], 1
    %1831 = vsyncpa [#allocation4], 1

</llo_original>
